<compile_context>
chip_gen: v7x
topology: tpu7x:2x2x1
jax: 0.10.0
libtpu: 0.0.40
codegen_flags: <defaults>
</compile_context>

<pallas_src>
import jax
import jax.numpy as jnp
from jax.experimental import pallas as pl
from jax.experimental.pallas import tpu as pltpu


def rnn_kernel(len_ref, emb_ref, wih_ref, whh_ref, b_ref, wfc_ref, bfc_ref,
               out_ref):
    B, S, _ = emb_ref.shape
    H = whh_ref.shape[0]

    lengths = len_ref[...]          # (B, 1) int32
    w_ih = wih_ref[...]             # (E, H)
    w_hh = whh_ref[...]             # (H, H)
    b = b_ref[...]                  # (1, H)  == b_ih + b_hh

    h = jnp.zeros((B, H), jnp.float32)

    # S is a small static Python int -> fully unrolled; the x-projection dots
    # are independent of h and get hoisted/overlapped by the scheduler, so the
    # serial critical path is S x (dot(h, W_hh) + add + tanh + select).
    for i in range(S):
        x_t = emb_ref[:, i, :]                                   # (B, E)
        pre = (jnp.dot(x_t, w_ih, preferred_element_type=jnp.float32)
               + jnp.dot(h, w_hh, preferred_element_type=jnp.float32)
               + b)
        h = jnp.where(i < lengths, jnp.tanh(pre), h)

    out_ref[...] = (jnp.dot(h, wfc_ref[...],
                            preferred_element_type=jnp.float32)
                    + bfc_ref[...]).astype(out_ref.dtype)


def rnn_classifier_forward(x_tokens, lengths, params):
    """x_tokens: (B, S) int32 token ids; lengths: (B,) int32."""
    embed_w = params["embed_w"]                      # (V, E), row 0 zeros
    w_ih_t = params["w_ih"].T                        # (E, H)
    w_hh_t = params["w_hh"].T                        # (H, H)
    b = (params["b_ih"] + params["b_hh"])[None, :]   # (1, H)   fused biases
    w_fc_t = params["w_fc"].T                        # (H, C)
    b_fc = params["b_fc"][None, :]                   # (1, C)

    B, S = x_tokens.shape
    C = w_fc_t.shape[1]

    # Glue: embedding gather (no clean tiny-gather Pallas equivalent at these
    # sizes). No transpose — kept batch-major (B, S, E).
    embedded = jnp.take(embed_w, x_tokens, axis=0)            # (B, S, E)
    lengths2d = lengths.astype(jnp.int32).reshape(B, 1)       # (B, 1)

    vmem = pl.BlockSpec(memory_space=pltpu.MemorySpace.VMEM)

    logits = pl.pallas_call(
        rnn_kernel,
        out_shape=jax.ShapeDtypeStruct((B, C), jnp.float32),
        in_specs=[vmem] * 7,
        out_specs=vmem,
    )(lengths2d, embedded, w_ih_t, w_hh_t, b, w_fc_t, b_fc)
    return logits


def reference_forward(x_tokens, lengths, params):
    embed_w = params["embed_w"]
    embedded = jnp.take(embed_w, x_tokens, axis=0)   # (B, S, E)
    B, S, _ = embedded.shape
    H = params["w_hh"].shape[0]
    h = jnp.zeros((B, H), jnp.float32)
    for i in range(S):
        x_t = embedded[:, i, :]
        h_next = jnp.tanh(x_t @ params["w_ih"].T + params["b_ih"]
                          + h @ params["w_hh"].T + params["b_hh"])
        m = (i < lengths).astype(jnp.float32)[:, None]
        h = m * h_next + (1.0 - m) * h
    return h @ params["w_fc"].T + params["b_fc"]


def init_params(key, vocab_size, embed_dim, hidden_dim, num_classes):
    ks = jax.random.split(key, 7)
    k = 1.0 / jnp.sqrt(hidden_dim)
    embed_w = jax.random.normal(ks[0], (vocab_size, embed_dim), jnp.float32)
    embed_w = embed_w.at[0].set(0.0)   # padding_idx=0
    params = {
        "embed_w": embed_w,
        "w_ih": jax.random.uniform(ks[1], (hidden_dim, embed_dim), jnp.float32, -k, k),
        "w_hh": jax.random.uniform(ks[2], (hidden_dim, hidden_dim), jnp.float32, -k, k),
        "b_ih": jax.random.uniform(ks[3], (hidden_dim,), jnp.float32, -k, k),
        "b_hh": jax.random.uniform(ks[4], (hidden_dim,), jnp.float32, -k, k),
        "w_fc": jax.random.uniform(ks[5], (num_classes, hidden_dim), jnp.float32, -k, k),
        "b_fc": jax.random.uniform(ks[6], (num_classes,), jnp.float32, -k, k),
    }
    return params


if __name__ == "__main__":
    VOCAB, EMBED, HIDDEN, CLASSES = 20, 32, 32, 8
    B, S = 4, 10

    key = jax.random.PRNGKey(0)
    kp, kx, kl = jax.random.split(key, 3)
    params = init_params(kp, VOCAB, EMBED, HIDDEN, CLASSES)

    x_tokens = jax.random.randint(kx, (B, S), 0, VOCAB, dtype=jnp.int32)
    lengths = jax.random.randint(kl, (B,), 1, S + 1, dtype=jnp.int32)

    logits = jax.block_until_ready(rnn_classifier_forward(x_tokens, lengths, params))
    ref = reference_forward(x_tokens, lengths, params)

    assert logits.shape == (B, CLASSES)
    assert jnp.allclose(logits, ref, atol=1e-5, rtol=1e-5)
    print("KERNEL_OK")
</pallas_src>

<mosaic_0001>
module attributes {stable_mosaic.version = 11 : i64} {
  func.func @rnn_kernel(%arg0: memref<4x1xi32, #tpu.memory_space<vmem>>, %arg1: memref<4x10x32xf32, #tpu.memory_space<vmem>>, %arg2: memref<32x32xf32, #tpu.memory_space<vmem>>, %arg3: memref<32x32xf32, #tpu.memory_space<vmem>>, %arg4: memref<1x32xf32, #tpu.memory_space<vmem>>, %arg5: memref<32x8xf32, #tpu.memory_space<vmem>>, %arg6: memref<1x8xf32, #tpu.memory_space<vmem>>, %arg7: memref<4x8xf32, #tpu.memory_space<vmem>>) attributes {dimension_semantics = [], scalar_prefetch = 0 : i64, scratch_operands = 0 : i64, tpu.core_type = #tpu.core_type<tc>} {
    %c0 = arith.constant 0 : index
    %c0_0 = arith.constant 0 : index
    %0 = vector.load %arg0[%c0, %c0_0] : memref<4x1xi32, #tpu.memory_space<vmem>>, vector<4x1xi32>
    %c0_1 = arith.constant 0 : index
    %c0_2 = arith.constant 0 : index
    %1 = vector.load %arg2[%c0_1, %c0_2] : memref<32x32xf32, #tpu.memory_space<vmem>>, vector<32x32xf32>
    %c0_3 = arith.constant 0 : index
    %c0_4 = arith.constant 0 : index
    %2 = vector.load %arg3[%c0_3, %c0_4] : memref<32x32xf32, #tpu.memory_space<vmem>>, vector<32x32xf32>
    %c0_5 = arith.constant 0 : index
    %c0_6 = arith.constant 0 : index
    %3 = vector.load %arg4[%c0_5, %c0_6] : memref<1x32xf32, #tpu.memory_space<vmem>>, vector<1x32xf32>
    %cst = arith.constant 0.000000e+00 : f32
    %4 = vector.broadcast %cst : f32 to vector<4x32xf32>
    %c0_7 = arith.constant 0 : index
    %c0_8 = arith.constant 0 : index
    %c0_9 = arith.constant 0 : index
    %5 = vector.load %arg1[%c0_7, %c0_8, %c0_9] : memref<4x10x32xf32, #tpu.memory_space<vmem>>, vector<4x1x32xf32>
    %6 = vector.shape_cast %5 : vector<4x1x32xf32> to vector<4x32xf32>
    %cst_10 = arith.constant dense<0.000000e+00> : vector<4x32xf32>
    %7 = tpu.matmul %6, %1, %cst_10 {dimension_numbers = #tpu.dot_dimension_numbers<[1], [0], [0], [1], [0, 0, 1, 1], [], []>} : vector<4x32xf32>, vector<32x32xf32>, vector<4x32xf32> -> vector<4x32xf32>
    %cst_11 = arith.constant dense<0.000000e+00> : vector<4x32xf32>
    %8 = tpu.matmul %4, %2, %cst_11 {dimension_numbers = #tpu.dot_dimension_numbers<[1], [0], [0], [1], [0, 0, 1, 1], [], []>} : vector<4x32xf32>, vector<32x32xf32>, vector<4x32xf32> -> vector<4x32xf32>
    %9 = arith.addf %7, %8 : vector<4x32xf32>
    %10 = vector.broadcast %3 : vector<1x32xf32> to vector<4x32xf32>
    %11 = arith.addf %9, %10 : vector<4x32xf32>
    %c0_i32 = arith.constant 0 : i32
    %12 = vector.broadcast %c0_i32 : i32 to vector<4x1xi32>
    %13 = arith.cmpi sgt, %0, %12 : vector<4x1xi32>
    %14 = math.tanh %11 : vector<4x32xf32>
    %15 = vector.shape_cast %13 : vector<4x1xi1> to vector<4x1xi1>
    %16 = vector.broadcast %15 : vector<4x1xi1> to vector<4x32xi1>
    %17 = arith.select %16, %14, %4 : vector<4x32xi1>, vector<4x32xf32>
    %c0_12 = arith.constant 0 : index
    %c1 = arith.constant 1 : index
    %c0_13 = arith.constant 0 : index
    %18 = vector.load %arg1[%c0_12, %c1, %c0_13] : memref<4x10x32xf32, #tpu.memory_space<vmem>>, vector<4x1x32xf32>
    %19 = vector.shape_cast %18 : vector<4x1x32xf32> to vector<4x32xf32>
    %cst_14 = arith.constant dense<0.000000e+00> : vector<4x32xf32>
    %20 = tpu.matmul %19, %1, %cst_14 {dimension_numbers = #tpu.dot_dimension_numbers<[1], [0], [0], [1], [0, 0, 1, 1], [], []>} : vector<4x32xf32>, vector<32x32xf32>, vector<4x32xf32> -> vector<4x32xf32>
    %cst_15 = arith.constant dense<0.000000e+00> : vector<4x32xf32>
    %21 = tpu.matmul %17, %2, %cst_15 {dimension_numbers = #tpu.dot_dimension_numbers<[1], [0], [0], [1], [0, 0, 1, 1], [], []>} : vector<4x32xf32>, vector<32x32xf32>, vector<4x32xf32> -> vector<4x32xf32>
    %22 = arith.addf %20, %21 : vector<4x32xf32>
    %23 = vector.broadcast %3 : vector<1x32xf32> to vector<4x32xf32>
    %24 = arith.addf %22, %23 : vector<4x32xf32>
    %c1_i32 = arith.constant 1 : i32
    %25 = vector.broadcast %c1_i32 : i32 to vector<4x1xi32>
    %26 = arith.cmpi sgt, %0, %25 : vector<4x1xi32>
    %27 = math.tanh %24 : vector<4x32xf32>
    %28 = vector.shape_cast %26 : vector<4x1xi1> to vector<4x1xi1>
    %29 = vector.broadcast %28 : vector<4x1xi1> to vector<4x32xi1>
    %30 = arith.select %29, %27, %17 : vector<4x32xi1>, vector<4x32xf32>
    %c0_16 = arith.constant 0 : index
    %c2 = arith.constant 2 : index
    %c0_17 = arith.constant 0 : index
    %31 = vector.load %arg1[%c0_16, %c2, %c0_17] : memref<4x10x32xf32, #tpu.memory_space<vmem>>, vector<4x1x32xf32>
    %32 = vector.shape_cast %31 : vector<4x1x32xf32> to vector<4x32xf32>
    %cst_18 = arith.constant dense<0.000000e+00> : vector<4x32xf32>
    %33 = tpu.matmul %32, %1, %cst_18 {dimension_numbers = #tpu.dot_dimension_numbers<[1], [0], [0], [1], [0, 0, 1, 1], [], []>} : vector<4x32xf32>, vector<32x32xf32>, vector<4x32xf32> -> vector<4x32xf32>
    %cst_19 = arith.constant dense<0.000000e+00> : vector<4x32xf32>
    %34 = tpu.matmul %30, %2, %cst_19 {dimension_numbers = #tpu.dot_dimension_numbers<[1], [0], [0], [1], [0, 0, 1, 1], [], []>} : vector<4x32xf32>, vector<32x32xf32>, vector<4x32xf32> -> vector<4x32xf32>
    %35 = arith.addf %33, %34 : vector<4x32xf32>
    %36 = vector.broadcast %3 : vector<1x32xf32> to vector<4x32xf32>
    %37 = arith.addf %35, %36 : vector<4x32xf32>
    %c2_i32 = arith.constant 2 : i32
    %38 = vector.broadcast %c2_i32 : i32 to vector<4x1xi32>
    %39 = arith.cmpi sgt, %0, %38 : vector<4x1xi32>
    %40 = math.tanh %37 : vector<4x32xf32>
    %41 = vector.shape_cast %39 : vector<4x1xi1> to vector<4x1xi1>
    %42 = vector.broadcast %41 : vector<4x1xi1> to vector<4x32xi1>
    %43 = arith.select %42, %40, %30 : vector<4x32xi1>, vector<4x32xf32>
    %c0_20 = arith.constant 0 : index
    %c3 = arith.constant 3 : index
    %c0_21 = arith.constant 0 : index
    %44 = vector.load %arg1[%c0_20, %c3, %c0_21] : memref<4x10x32xf32, #tpu.memory_space<vmem>>, vector<4x1x32xf32>
    %45 = vector.shape_cast %44 : vector<4x1x32xf32> to vector<4x32xf32>
    %cst_22 = arith.constant dense<0.000000e+00> : vector<4x32xf32>
    %46 = tpu.matmul %45, %1, %cst_22 {dimension_numbers = #tpu.dot_dimension_numbers<[1], [0], [0], [1], [0, 0, 1, 1], [], []>} : vector<4x32xf32>, vector<32x32xf32>, vector<4x32xf32> -> vector<4x32xf32>
    %cst_23 = arith.constant dense<0.000000e+00> : vector<4x32xf32>
    %47 = tpu.matmul %43, %2, %cst_23 {dimension_numbers = #tpu.dot_dimension_numbers<[1], [0], [0], [1], [0, 0, 1, 1], [], []>} : vector<4x32xf32>, vector<32x32xf32>, vector<4x32xf32> -> vector<4x32xf32>
    %48 = arith.addf %46, %47 : vector<4x32xf32>
    %49 = vector.broadcast %3 : vector<1x32xf32> to vector<4x32xf32>
    %50 = arith.addf %48, %49 : vector<4x32xf32>
    %c3_i32 = arith.constant 3 : i32
    %51 = vector.broadcast %c3_i32 : i32 to vector<4x1xi32>
    %52 = arith.cmpi sgt, %0, %51 : vector<4x1xi32>
    %53 = math.tanh %50 : vector<4x32xf32>
    %54 = vector.shape_cast %52 : vector<4x1xi1> to vector<4x1xi1>
    %55 = vector.broadcast %54 : vector<4x1xi1> to vector<4x32xi1>
    %56 = arith.select %55, %53, %43 : vector<4x32xi1>, vector<4x32xf32>
    %c0_24 = arith.constant 0 : index
    %c4 = arith.constant 4 : index
    %c0_25 = arith.constant 0 : index
    %57 = vector.load %arg1[%c0_24, %c4, %c0_25] : memref<4x10x32xf32, #tpu.memory_space<vmem>>, vector<4x1x32xf32>
    %58 = vector.shape_cast %57 : vector<4x1x32xf32> to vector<4x32xf32>
    %cst_26 = arith.constant dense<0.000000e+00> : vector<4x32xf32>
    %59 = tpu.matmul %58, %1, %cst_26 {dimension_numbers = #tpu.dot_dimension_numbers<[1], [0], [0], [1], [0, 0, 1, 1], [], []>} : vector<4x32xf32>, vector<32x32xf32>, vector<4x32xf32> -> vector<4x32xf32>
    %cst_27 = arith.constant dense<0.000000e+00> : vector<4x32xf32>
    %60 = tpu.matmul %56, %2, %cst_27 {dimension_numbers = #tpu.dot_dimension_numbers<[1], [0], [0], [1], [0, 0, 1, 1], [], []>} : vector<4x32xf32>, vector<32x32xf32>, vector<4x32xf32> -> vector<4x32xf32>
    %61 = arith.addf %59, %60 : vector<4x32xf32>
    %62 = vector.broadcast %3 : vector<1x32xf32> to vector<4x32xf32>
    %63 = arith.addf %61, %62 : vector<4x32xf32>
    %c4_i32 = arith.constant 4 : i32
    %64 = vector.broadcast %c4_i32 : i32 to vector<4x1xi32>
    %65 = arith.cmpi sgt, %0, %64 : vector<4x1xi32>
    %66 = math.tanh %63 : vector<4x32xf32>
    %67 = vector.shape_cast %65 : vector<4x1xi1> to vector<4x1xi1>
    %68 = vector.broadcast %67 : vector<4x1xi1> to vector<4x32xi1>
    %69 = arith.select %68, %66, %56 : vector<4x32xi1>, vector<4x32xf32>
    %c0_28 = arith.constant 0 : index
    %c5 = arith.constant 5 : index
    %c0_29 = arith.constant 0 : index
    %70 = vector.load %arg1[%c0_28, %c5, %c0_29] : memref<4x10x32xf32, #tpu.memory_space<vmem>>, vector<4x1x32xf32>
    %71 = vector.shape_cast %70 : vector<4x1x32xf32> to vector<4x32xf32>
    %cst_30 = arith.constant dense<0.000000e+00> : vector<4x32xf32>
    %72 = tpu.matmul %71, %1, %cst_30 {dimension_numbers = #tpu.dot_dimension_numbers<[1], [0], [0], [1], [0, 0, 1, 1], [], []>} : vector<4x32xf32>, vector<32x32xf32>, vector<4x32xf32> -> vector<4x32xf32>
    %cst_31 = arith.constant dense<0.000000e+00> : vector<4x32xf32>
    %73 = tpu.matmul %69, %2, %cst_31 {dimension_numbers = #tpu.dot_dimension_numbers<[1], [0], [0], [1], [0, 0, 1, 1], [], []>} : vector<4x32xf32>, vector<32x32xf32>, vector<4x32xf32> -> vector<4x32xf32>
    %74 = arith.addf %72, %73 : vector<4x32xf32>
    %75 = vector.broadcast %3 : vector<1x32xf32> to vector<4x32xf32>
    %76 = arith.addf %74, %75 : vector<4x32xf32>
    %c5_i32 = arith.constant 5 : i32
    %77 = vector.broadcast %c5_i32 : i32 to vector<4x1xi32>
    %78 = arith.cmpi sgt, %0, %77 : vector<4x1xi32>
    %79 = math.tanh %76 : vector<4x32xf32>
    %80 = vector.shape_cast %78 : vector<4x1xi1> to vector<4x1xi1>
    %81 = vector.broadcast %80 : vector<4x1xi1> to vector<4x32xi1>
    %82 = arith.select %81, %79, %69 : vector<4x32xi1>, vector<4x32xf32>
    %c0_32 = arith.constant 0 : index
    %c6 = arith.constant 6 : index
    %c0_33 = arith.constant 0 : index
    %83 = vector.load %arg1[%c0_32, %c6, %c0_33] : memref<4x10x32xf32, #tpu.memory_space<vmem>>, vector<4x1x32xf32>
    %84 = vector.shape_cast %83 : vector<4x1x32xf32> to vector<4x32xf32>
    %cst_34 = arith.constant dense<0.000000e+00> : vector<4x32xf32>
    %85 = tpu.matmul %84, %1, %cst_34 {dimension_numbers = #tpu.dot_dimension_numbers<[1], [0], [0], [1], [0, 0, 1, 1], [], []>} : vector<4x32xf32>, vector<32x32xf32>, vector<4x32xf32> -> vector<4x32xf32>
    %cst_35 = arith.constant dense<0.000000e+00> : vector<4x32xf32>
    %86 = tpu.matmul %82, %2, %cst_35 {dimension_numbers = #tpu.dot_dimension_numbers<[1], [0], [0], [1], [0, 0, 1, 1], [], []>} : vector<4x32xf32>, vector<32x32xf32>, vector<4x32xf32> -> vector<4x32xf32>
    %87 = arith.addf %85, %86 : vector<4x32xf32>
    %88 = vector.broadcast %3 : vector<1x32xf32> to vector<4x32xf32>
    %89 = arith.addf %87, %88 : vector<4x32xf32>
    %c6_i32 = arith.constant 6 : i32
    %90 = vector.broadcast %c6_i32 : i32 to vector<4x1xi32>
    %91 = arith.cmpi sgt, %0, %90 : vector<4x1xi32>
    %92 = math.tanh %89 : vector<4x32xf32>
    %93 = vector.shape_cast %91 : vector<4x1xi1> to vector<4x1xi1>
    %94 = vector.broadcast %93 : vector<4x1xi1> to vector<4x32xi1>
    %95 = arith.select %94, %92, %82 : vector<4x32xi1>, vector<4x32xf32>
    %c0_36 = arith.constant 0 : index
    %c7 = arith.constant 7 : index
    %c0_37 = arith.constant 0 : index
    %96 = vector.load %arg1[%c0_36, %c7, %c0_37] : memref<4x10x32xf32, #tpu.memory_space<vmem>>, vector<4x1x32xf32>
    %97 = vector.shape_cast %96 : vector<4x1x32xf32> to vector<4x32xf32>
    %cst_38 = arith.constant dense<0.000000e+00> : vector<4x32xf32>
    %98 = tpu.matmul %97, %1, %cst_38 {dimension_numbers = #tpu.dot_dimension_numbers<[1], [0], [0], [1], [0, 0, 1, 1], [], []>} : vector<4x32xf32>, vector<32x32xf32>, vector<4x32xf32> -> vector<4x32xf32>
    %cst_39 = arith.constant dense<0.000000e+00> : vector<4x32xf32>
    %99 = tpu.matmul %95, %2, %cst_39 {dimension_numbers = #tpu.dot_dimension_numbers<[1], [0], [0], [1], [0, 0, 1, 1], [], []>} : vector<4x32xf32>, vector<32x32xf32>, vector<4x32xf32> -> vector<4x32xf32>
    %100 = arith.addf %98, %99 : vector<4x32xf32>
    %101 = vector.broadcast %3 : vector<1x32xf32> to vector<4x32xf32>
    %102 = arith.addf %100, %101 : vector<4x32xf32>
    %c7_i32 = arith.constant 7 : i32
    %103 = vector.broadcast %c7_i32 : i32 to vector<4x1xi32>
    %104 = arith.cmpi sgt, %0, %103 : vector<4x1xi32>
    %105 = math.tanh %102 : vector<4x32xf32>
    %106 = vector.shape_cast %104 : vector<4x1xi1> to vector<4x1xi1>
    %107 = vector.broadcast %106 : vector<4x1xi1> to vector<4x32xi1>
    %108 = arith.select %107, %105, %95 : vector<4x32xi1>, vector<4x32xf32>
    %c0_40 = arith.constant 0 : index
    %c8 = arith.constant 8 : index
    %c0_41 = arith.constant 0 : index
    %109 = vector.load %arg1[%c0_40, %c8, %c0_41] : memref<4x10x32xf32, #tpu.memory_space<vmem>>, vector<4x1x32xf32>
    %110 = vector.shape_cast %109 : vector<4x1x32xf32> to vector<4x32xf32>
    %cst_42 = arith.constant dense<0.000000e+00> : vector<4x32xf32>
    %111 = tpu.matmul %110, %1, %cst_42 {dimension_numbers = #tpu.dot_dimension_numbers<[1], [0], [0], [1], [0, 0, 1, 1], [], []>} : vector<4x32xf32>, vector<32x32xf32>, vector<4x32xf32> -> vector<4x32xf32>
    %cst_43 = arith.constant dense<0.000000e+00> : vector<4x32xf32>
    %112 = tpu.matmul %108, %2, %cst_43 {dimension_numbers = #tpu.dot_dimension_numbers<[1], [0], [0], [1], [0, 0, 1, 1], [], []>} : vector<4x32xf32>, vector<32x32xf32>, vector<4x32xf32> -> vector<4x32xf32>
    %113 = arith.addf %111, %112 : vector<4x32xf32>
    %114 = vector.broadcast %3 : vector<1x32xf32> to vector<4x32xf32>
    %115 = arith.addf %113, %114 : vector<4x32xf32>
    %c8_i32 = arith.constant 8 : i32
    %116 = vector.broadcast %c8_i32 : i32 to vector<4x1xi32>
    %117 = arith.cmpi sgt, %0, %116 : vector<4x1xi32>
    %118 = math.tanh %115 : vector<4x32xf32>
    %119 = vector.shape_cast %117 : vector<4x1xi1> to vector<4x1xi1>
    %120 = vector.broadcast %119 : vector<4x1xi1> to vector<4x32xi1>
    %121 = arith.select %120, %118, %108 : vector<4x32xi1>, vector<4x32xf32>
    %c0_44 = arith.constant 0 : index
    %c9 = arith.constant 9 : index
    %c0_45 = arith.constant 0 : index
    %122 = vector.load %arg1[%c0_44, %c9, %c0_45] : memref<4x10x32xf32, #tpu.memory_space<vmem>>, vector<4x1x32xf32>
    %123 = vector.shape_cast %122 : vector<4x1x32xf32> to vector<4x32xf32>
    %cst_46 = arith.constant dense<0.000000e+00> : vector<4x32xf32>
    %124 = tpu.matmul %123, %1, %cst_46 {dimension_numbers = #tpu.dot_dimension_numbers<[1], [0], [0], [1], [0, 0, 1, 1], [], []>} : vector<4x32xf32>, vector<32x32xf32>, vector<4x32xf32> -> vector<4x32xf32>
    %cst_47 = arith.constant dense<0.000000e+00> : vector<4x32xf32>
    %125 = tpu.matmul %121, %2, %cst_47 {dimension_numbers = #tpu.dot_dimension_numbers<[1], [0], [0], [1], [0, 0, 1, 1], [], []>} : vector<4x32xf32>, vector<32x32xf32>, vector<4x32xf32> -> vector<4x32xf32>
    %126 = arith.addf %124, %125 : vector<4x32xf32>
    %127 = vector.broadcast %3 : vector<1x32xf32> to vector<4x32xf32>
    %128 = arith.addf %126, %127 : vector<4x32xf32>
    %c9_i32 = arith.constant 9 : i32
    %129 = vector.broadcast %c9_i32 : i32 to vector<4x1xi32>
    %130 = arith.cmpi sgt, %0, %129 : vector<4x1xi32>
    %131 = math.tanh %128 : vector<4x32xf32>
    %132 = vector.shape_cast %130 : vector<4x1xi1> to vector<4x1xi1>
    %133 = vector.broadcast %132 : vector<4x1xi1> to vector<4x32xi1>
    %134 = arith.select %133, %131, %121 : vector<4x32xi1>, vector<4x32xf32>
    %c0_48 = arith.constant 0 : index
    %c0_49 = arith.constant 0 : index
    %135 = vector.load %arg5[%c0_48, %c0_49] : memref<32x8xf32, #tpu.memory_space<vmem>>, vector<32x8xf32>
    %cst_50 = arith.constant dense<0.000000e+00> : vector<4x8xf32>
    %136 = tpu.matmul %134, %135, %cst_50 {dimension_numbers = #tpu.dot_dimension_numbers<[1], [0], [0], [1], [0, 0, 1, 1], [], []>} : vector<4x32xf32>, vector<32x8xf32>, vector<4x8xf32> -> vector<4x8xf32>
    %c0_51 = arith.constant 0 : index
    %c0_52 = arith.constant 0 : index
    %137 = vector.load %arg6[%c0_51, %c0_52] : memref<1x8xf32, #tpu.memory_space<vmem>>, vector<1x8xf32>
    %138 = vector.broadcast %137 : vector<1x8xf32> to vector<4x8xf32>
    %139 = arith.addf %136, %138 : vector<4x8xf32>
    %c0_53 = arith.constant 0 : index
    %c0_54 = arith.constant 0 : index
    %140 = vector.load %arg7[%c0_53, %c0_54] : memref<4x8xf32, #tpu.memory_space<vmem>>, vector<4x8xf32>
    tpu.vector_store %arg7[%c0_53, %c0_54], %139 {strides = array<i32>} : memref<4x8xf32, #tpu.memory_space<vmem>>, vector<4x8xf32>,
    return
  }
}

</mosaic_0001>

<llo_original>
// kernel: tpu_custom_call.1
$region0: #{tpu_custom_call.1}
  #allocation0 [shape = 'u32[]', space=smem, size = 0x4, offset = 0x4, fixed_abs, tag = 'smem constant byte address 0x4 - core index']
  #allocation1 [shape = 'u32[144,128]{1,0:T(1,128)}', space=vmem, size = 0x12000, scoped, tag = 'internal scratch']
  %s0 = inlined_call_operand.vmem [shape: s32[4,1], index: 0, kind: input, shape index: {}]
  %s1 = inlined_call_operand.vmem [shape: f32[4,10,32], index: 1, kind: input, shape index: {}]
  %s2 = inlined_call_operand.vmem [shape: f32[32,32], index: 2, kind: input, shape index: {}]
  %s3 = inlined_call_operand.vmem [shape: f32[32,32], index: 3, kind: input, shape index: {}]
  %s4 = inlined_call_operand.vmem [shape: f32[1,32], index: 4, kind: input, shape index: {}]
  %s5 = inlined_call_operand.vmem [shape: f32[32,8], index: 5, kind: input, shape index: {}]
  %s6 = inlined_call_operand.vmem [shape: f32[1,8], index: 6, kind: input, shape index: {}]
  %s7 = inlined_call_operand.hbm [shape: f32[4,8], index: 7, kind: output, shape index: {}]
  %s8 = sld [smem:[#allocation0]]
  $region38: #{tpu_custom_call.1} parent=0
    _
  %s10 = ssub.s32 1, %s8
  %s11 = scalar_select 0, %s10, %s8
  $region1: #{tpu_custom_call.1} parent=0
    #allocation2 [shape = 'u8[2048]{0}', space=vmem, size = 0x800, scoped, tag = 'output window, operand 0, single buffered']
    #allocation3 [shape = 's32[1]{0}', space=sflag, size = 0x4, scoped, tag = 'scoped memory for tpu_custom_call.1']
    %12 = vsyncpa [#allocation3], 0
    // Predicated region
    $region2: #{tpu_custom_call.1} parent=1 // pred_check
      _
    $region3: #{tpu_custom_call.1} parent=1 // pred_check_branch
      %14 = sbr.rel (0) target = $region5
    $region4: #{tpu_custom_call.1} parent=1 // pred_region
      _
    $region5: #{tpu_custom_call.1} parent=1 // pred_fallthru
      _
    // Predicated region
    $region6: #{tpu_custom_call.1} parent=1 // pred_check
      _
    $region7: #{tpu_custom_call.1} parent=1 // pred_check_branch
      %16 = sbr.rel (0) target = $region9
    $region8: #{tpu_custom_call.1} parent=1 // pred_region
      _
    $region9: #{tpu_custom_call.1} parent=1 // pred_fallthru
      _
    // Predicated region
    $region10: #{tpu_custom_call.1} parent=1 // pred_check
      _
    $region11: #{tpu_custom_call.1} parent=1 // pred_check_branch
      %18 = sbr.rel (0) target = $region13
    $region12: #{tpu_custom_call.1} parent=1 // pred_region
      _
    $region13: #{tpu_custom_call.1} parent=1 // pred_fallthru
      _
    // Predicated region
    $region14: #{tpu_custom_call.1} parent=1 // pred_check
      _
    $region15: #{tpu_custom_call.1} parent=1 // pred_check_branch
      %20 = sbr.rel (0) target = $region17
    $region16: #{tpu_custom_call.1} parent=1 // pred_region
      _
    $region17: #{tpu_custom_call.1} parent=1 // pred_fallthru
      _
    // Predicated region
    $region18: #{tpu_custom_call.1} parent=1 // pred_check
      _
    $region19: #{tpu_custom_call.1} parent=1 // pred_check_branch
      %22 = sbr.rel (0) target = $region21
    $region20: #{tpu_custom_call.1} parent=1 // pred_region
      _
    $region21: #{tpu_custom_call.1} parent=1 // pred_fallthru
      _
    // Predicated region
    $region22: #{tpu_custom_call.1} parent=1 // pred_check
      _
    $region23: #{tpu_custom_call.1} parent=1 // pred_check_branch
      %24 = sbr.rel (0) target = $region25
    $region24: #{tpu_custom_call.1} parent=1 // pred_region
      _
    $region25: #{tpu_custom_call.1} parent=1 // pred_fallthru
      _
    // Predicated region
    $region26: #{tpu_custom_call.1} parent=1 // pred_check
      _
    $region27: #{tpu_custom_call.1} parent=1 // pred_check_branch
      %26 = sbr.rel (0) target = $region29
    $region28: #{tpu_custom_call.1} parent=1 // pred_region
      _
    $region29: #{tpu_custom_call.1} parent=1 // pred_fallthru
      _
    %v27 = vld [vmem:[%s0] sm:$0xf]
    %v28 = vld [vmem:[%s2] sm:$0xff]
    %v29 = vld [vmem:[%s2 + $0x8] sm:$0xff]
    %v30 = vld [vmem:[%s2 + $0x10] sm:$0xff]
    %v31 = vld [vmem:[%s2 + $0x18] sm:$0xff]
    %v32 = vld [vmem:[%s3] sm:$0xff]
    %v33 = vld [vmem:[%s3 + $0x8] sm:$0xff]
    %v34 = vld [vmem:[%s3 + $0x10] sm:$0xff]
    %v35 = vld [vmem:[%s3 + $0x18] sm:$0xff]
    %v36 = vld [vmem:[%s4] sm:$0x1]
    %v37 = vld [vmem:[%s1] sm:$0x1]
    %v38 = vld [vmem:[%s1 + $0x10] sm:$0x1]
    %v39 = vld [vmem:[%s1 + $0x20] sm:$0x1]
    %v40 = vld [vmem:[%s1 + $0x30] sm:$0x1]
    %vm41 = vcmask 261120
    %v43 = vsel %vm41, 0.0, 0
    %45 = vmatprep.subr.mxu0 0.0
    %46 = vmatpush1.msra.mxu0 %v32
    %47 = vmatprep.subr.mxu0 0.0
    %48 = vmatpush1.msra.mxu0 %v33
    %49 = vmatprep.subr.mxu0 0.0
    %50 = vmatpush1.msra.mxu0 %v34
    %51 = vmatprep.subr.mxu0 0.0
    %52 = vmatpush1.msra.mxu0 %v35
    %53 = vmatprep.subr.mxu0 0.0
    %54 = vmatpush1.msra.mxu0 0.0
    %55 = vmatprep.subr.mxu0 0.0
    %56 = vmatpush1.msra.mxu0 0.0
    %57 = vmatprep.subr.mxu0 0.0
    %58 = vmatpush1.msra.mxu0 0.0
    %59 = vmatprep.subr.mxu0 0.0
    %60 = vmatpush1.msra.mxu0 0.0
    %61 = vmatprep.subr.mxu0 0.0
    %62 = vmatpush1.msra.mxu0 0.0
    %63 = vmatprep.subr.mxu0 0.0
    %64 = vmatpush1.msra.mxu0 0.0
    %65 = vmatprep.subr.mxu0 0.0
    %66 = vmatpush1.msra.mxu0 0.0
    %67 = vmatprep.subr.mxu0 0.0
    %68 = vmatpush1.msra.mxu0 0.0
    %69 = vmatprep.subr.mxu0 0.0
    %70 = vmatpush1.msra.mxu0 0.0
    %71 = vmatprep.subr.mxu0 0.0
    %72 = vmatpush1.msra.mxu0 0.0
    %73 = vmatprep.subr.mxu0 0.0
    %74 = vmatpush1.msra.mxu0 0.0
    %75 = vmatprep.subr.mxu0 0.0
    %76 = vmatpush1.msra.mxu0 0.0
    %77 = vmatprep.subr.mxu0 0.0
    %78 = vmatpush1.msra.mxu0 0.0
    %79 = vmatprep.subr.mxu0 0.0
    %80 = vmatpush1.msra.mxu0 0.0
    %81 = vmatprep.subr.mxu0 0.0
    %82 = vmatpush1.msra.mxu0 0.0
    %83 = vmatprep.subr.mxu0 0.0
    %84 = vmatpush1.msra.mxu0 0.0
    %85 = vmatprep.subr.mxu0 0.0
    %86 = vmatpush1.msra.mxu0 0.0
    %87 = vmatprep.subr.mxu0 0.0
    %88 = vmatpush1.msra.mxu0 0.0
    %89 = vmatprep.subr.mxu0 0.0
    %90 = vmatpush1.msra.mxu0 0.0
    %91 = vmatprep.subr.mxu0 0.0
    %92 = vmatpush1.msra.mxu0 0.0
    %93 = vmatprep.subr.mxu0 0.0
    %94 = vmatpush1.msra.mxu0 0.0
    %95 = vmatprep.subr.mxu0 0.0
    %96 = vmatpush1.msra.mxu0 0.0
    %97 = vmatprep.subr.mxu0 0.0
    %98 = vmatpush1.msra.mxu0 0.0
    %99 = vmatprep.subr.mxu0 0.0
    %100 = vmatpush1.msra.mxu0 0.0
    %101 = vmatprep.subr.mxu0 0.0
    %102 = vmatpush1.msra.mxu0 0.0
    %103 = vmatprep.subr.mxu0 0.0
    %104 = vmatpush1.msra.mxu0 0.0
    %105 = vmatprep.subr.mxu0 0.0
    %106 = vmatpush1.msra.mxu0 0.0
    %107 = vmatprep.subr.mxu0 0.0
    %108 = vmatpush1.msra.mxu0 0.0
    %109 = vmatprep.mubr.f32.mxu0 0.0
    %110 = vmatmul.mubr.f32.gmra.mrb[0].mxu0 %v43
    %v111 = vpop.f32.mrb[0].mxu0
    %v112 = vadd.f32 0.0, %v111
    %v113 = vpop.f32.mrb[0].mxu0
    %114 = vdwg.mxu0
    %v119 = vrot.slane %v38, 7
    %vm120 = vcmask 1041409
    %v121 = vsel %vm120, %v119, %v37
    %v122 = vrot.slane %v39, 6
    %vm123 = vcmask 1042434
    %v124 = vsel %vm123, %v122, %v121
    %v125 = vrot.slane %v40, 5
    %vm126 = vcmask 1043459
    %v127 = vsel %vm126, %v125, %v124
    %v128 = vsel %vm41, %v127, 0
    %130 = vmatprep.subr.mxu0 0.0
    %131 = vmatpush1.msra.mxu0 %v28
    %132 = vmatprep.subr.mxu0 0.0
    %133 = vmatpush1.msra.mxu0 %v29
    %134 = vmatprep.subr.mxu0 0.0
    %135 = vmatpush1.msra.mxu0 %v30
    %136 = vmatprep.subr.mxu0 0.0
    %137 = vmatpush1.msra.mxu0 %v31
    %138 = vmatprep.subr.mxu0 0.0
    %139 = vmatpush1.msra.mxu0 0.0
    %140 = vmatprep.subr.mxu0 0.0
    %141 = vmatpush1.msra.mxu0 0.0
    %142 = vmatprep.subr.mxu0 0.0
    %143 = vmatpush1.msra.mxu0 0.0
    %144 = vmatprep.subr.mxu0 0.0
    %145 = vmatpush1.msra.mxu0 0.0
    %146 = vmatprep.subr.mxu0 0.0
    %147 = vmatpush1.msra.mxu0 0.0
    %148 = vmatprep.subr.mxu0 0.0
    %149 = vmatpush1.msra.mxu0 0.0
    %150 = vmatprep.subr.mxu0 0.0
    %151 = vmatpush1.msra.mxu0 0.0
    %152 = vmatprep.subr.mxu0 0.0
    %153 = vmatpush1.msra.mxu0 0.0
    %154 = vmatprep.subr.mxu0 0.0
    %155 = vmatpush1.msra.mxu0 0.0
    %156 = vmatprep.subr.mxu0 0.0
    %157 = vmatpush1.msra.mxu0 0.0
    %158 = vmatprep.subr.mxu0 0.0
    %159 = vmatpush1.msra.mxu0 0.0
    %160 = vmatprep.subr.mxu0 0.0
    %161 = vmatpush1.msra.mxu0 0.0
    %162 = vmatprep.subr.mxu0 0.0
    %163 = vmatpush1.msra.mxu0 0.0
    %164 = vmatprep.subr.mxu0 0.0
    %165 = vmatpush1.msra.mxu0 0.0
    %166 = vmatprep.subr.mxu0 0.0
    %167 = vmatpush1.msra.mxu0 0.0
    %168 = vmatprep.subr.mxu0 0.0
    %169 = vmatpush1.msra.mxu0 0.0
    %170 = vmatprep.subr.mxu0 0.0
    %171 = vmatpush1.msra.mxu0 0.0
    %172 = vmatprep.subr.mxu0 0.0
    %173 = vmatpush1.msra.mxu0 0.0
    %174 = vmatprep.subr.mxu0 0.0
    %175 = vmatpush1.msra.mxu0 0.0
    %176 = vmatprep.subr.mxu0 0.0
    %177 = vmatpush1.msra.mxu0 0.0
    %178 = vmatprep.subr.mxu0 0.0
    %179 = vmatpush1.msra.mxu0 0.0
    %180 = vmatprep.subr.mxu0 0.0
    %181 = vmatpush1.msra.mxu0 0.0
    %182 = vmatprep.subr.mxu0 0.0
    %183 = vmatpush1.msra.mxu0 0.0
    %184 = vmatprep.subr.mxu0 0.0
    %185 = vmatpush1.msra.mxu0 0.0
    %186 = vmatprep.subr.mxu0 0.0
    %187 = vmatpush1.msra.mxu0 0.0
    %188 = vmatprep.subr.mxu0 0.0
    %189 = vmatpush1.msra.mxu0 0.0
    %190 = vmatprep.subr.mxu0 0.0
    %191 = vmatpush1.msra.mxu0 0.0
    %192 = vmatprep.subr.mxu0 0.0
    %193 = vmatpush1.msra.mxu0 0.0
    %194 = vmatprep.mubr.f32.mxu0 0.0
    %195 = vmatmul.mubr.f32.gmra.mrb[0].mxu0 %v128
    %v196 = vpop.f32.mrb[0].mxu0
    %v197 = vadd.f32 %v112, %v196
    %v198 = vpop.f32.mrb[0].mxu0
    %199 = vdwg.mxu0
    %v201 = vlaneseq
    %v202 = vshrl.u32 %v201, 7
    %v203 = vsub.s32 0, %v202
    %v204 = vrot.slane %v36, %v203
    %v206 = vadd.f32 %v197, %v204
    %vm207 = vcmp.gt.s32.totalorder %v27, 0
    %v208 = vtanh.pop %v206
    %v209 = vsel %vm207, 1, 0
    %210 = vset.pattern.permute.xlu0 0
    %211 = vperm.xlu0 %210, %v209
    %v212 = vpop.permute.xlu0 %211
    %vm213 = vcmp.eq.s32.totalorder %v212, 1
    %v214 = vsel %vm213, %v208, 0.0
    %v215 = vld [vmem:[%s1 + $0x1] sm:$0x1]
    %v216 = vld [vmem:[%s1 + $0x11] sm:$0x1]
    %v217 = vld [vmem:[%s1 + $0x21] sm:$0x1]
    %v218 = vld [vmem:[%s1 + $0x31] sm:$0x1]
    %v220 = vsel %vm41, %v214, 0
    %222 = vmatprep.subr.mxu0 0.0
    %223 = vmatpush1.msra.mxu0 %v32
    %224 = vmatprep.subr.mxu0 0.0
    %225 = vmatpush1.msra.mxu0 %v33
    %226 = vmatprep.subr.mxu0 0.0
    %227 = vmatpush1.msra.mxu0 %v34
    %228 = vmatprep.subr.mxu0 0.0
    %229 = vmatpush1.msra.mxu0 %v35
    %230 = vmatprep.subr.mxu0 0.0
    %231 = vmatpush1.msra.mxu0 0.0
    %232 = vmatprep.subr.mxu0 0.0
    %233 = vmatpush1.msra.mxu0 0.0
    %234 = vmatprep.subr.mxu0 0.0
    %235 = vmatpush1.msra.mxu0 0.0
    %236 = vmatprep.subr.mxu0 0.0
    %237 = vmatpush1.msra.mxu0 0.0
    %238 = vmatprep.subr.mxu0 0.0
    %239 = vmatpush1.msra.mxu0 0.0
    %240 = vmatprep.subr.mxu0 0.0
    %241 = vmatpush1.msra.mxu0 0.0
    %242 = vmatprep.subr.mxu0 0.0
    %243 = vmatpush1.msra.mxu0 0.0
    %244 = vmatprep.subr.mxu0 0.0
    %245 = vmatpush1.msra.mxu0 0.0
    %246 = vmatprep.subr.mxu0 0.0
    %247 = vmatpush1.msra.mxu0 0.0
    %248 = vmatprep.subr.mxu0 0.0
    %249 = vmatpush1.msra.mxu0 0.0
    %250 = vmatprep.subr.mxu0 0.0
    %251 = vmatpush1.msra.mxu0 0.0
    %252 = vmatprep.subr.mxu0 0.0
    %253 = vmatpush1.msra.mxu0 0.0
    %254 = vmatprep.subr.mxu0 0.0
    %255 = vmatpush1.msra.mxu0 0.0
    %256 = vmatprep.subr.mxu0 0.0
    %257 = vmatpush1.msra.mxu0 0.0
    %258 = vmatprep.subr.mxu0 0.0
    %259 = vmatpush1.msra.mxu0 0.0
    %260 = vmatprep.subr.mxu0 0.0
    %261 = vmatpush1.msra.mxu0 0.0
    %262 = vmatprep.subr.mxu0 0.0
    %263 = vmatpush1.msra.mxu0 0.0
    %264 = vmatprep.subr.mxu0 0.0
    %265 = vmatpush1.msra.mxu0 0.0
    %266 = vmatprep.subr.mxu0 0.0
    %267 = vmatpush1.msra.mxu0 0.0
    %268 = vmatprep.subr.mxu0 0.0
    %269 = vmatpush1.msra.mxu0 0.0
    %270 = vmatprep.subr.mxu0 0.0
    %271 = vmatpush1.msra.mxu0 0.0
    %272 = vmatprep.subr.mxu0 0.0
    %273 = vmatpush1.msra.mxu0 0.0
    %274 = vmatprep.subr.mxu0 0.0
    %275 = vmatpush1.msra.mxu0 0.0
    %276 = vmatprep.subr.mxu0 0.0
    %277 = vmatpush1.msra.mxu0 0.0
    %278 = vmatprep.subr.mxu0 0.0
    %279 = vmatpush1.msra.mxu0 0.0
    %280 = vmatprep.subr.mxu0 0.0
    %281 = vmatpush1.msra.mxu0 0.0
    %282 = vmatprep.subr.mxu0 0.0
    %283 = vmatpush1.msra.mxu0 0.0
    %284 = vmatprep.subr.mxu0 0.0
    %285 = vmatpush1.msra.mxu0 0.0
    %286 = vmatprep.mubr.f32.mxu0 0.0
    %287 = vmatmul.mubr.f32.gmra.mrb[0].mxu0 %v220
    %v288 = vpop.f32.mrb[0].mxu0
    %v289 = vadd.f32 0.0, %v288
    %v290 = vpop.f32.mrb[0].mxu0
    %291 = vdwg.mxu0
    %v296 = vrot.slane %v216, 7
    %v297 = vsel %vm120, %v296, %v215
    %v298 = vrot.slane %v217, 6
    %v299 = vsel %vm123, %v298, %v297
    %v300 = vrot.slane %v218, 5
    %v301 = vsel %vm126, %v300, %v299
    %v302 = vsel %vm41, %v301, 0
    %304 = vmatprep.subr.mxu0 0.0
    %305 = vmatpush1.msra.mxu0 %v28
    %306 = vmatprep.subr.mxu0 0.0
    %307 = vmatpush1.msra.mxu0 %v29
    %308 = vmatprep.subr.mxu0 0.0
    %309 = vmatpush1.msra.mxu0 %v30
    %310 = vmatprep.subr.mxu0 0.0
    %311 = vmatpush1.msra.mxu0 %v31
    %312 = vmatprep.subr.mxu0 0.0
    %313 = vmatpush1.msra.mxu0 0.0
    %314 = vmatprep.subr.mxu0 0.0
    %315 = vmatpush1.msra.mxu0 0.0
    %316 = vmatprep.subr.mxu0 0.0
    %317 = vmatpush1.msra.mxu0 0.0
    %318 = vmatprep.subr.mxu0 0.0
    %319 = vmatpush1.msra.mxu0 0.0
    %320 = vmatprep.subr.mxu0 0.0
    %321 = vmatpush1.msra.mxu0 0.0
    %322 = vmatprep.subr.mxu0 0.0
    %323 = vmatpush1.msra.mxu0 0.0
    %324 = vmatprep.subr.mxu0 0.0
    %325 = vmatpush1.msra.mxu0 0.0
    %326 = vmatprep.subr.mxu0 0.0
    %327 = vmatpush1.msra.mxu0 0.0
    %328 = vmatprep.subr.mxu0 0.0
    %329 = vmatpush1.msra.mxu0 0.0
    %330 = vmatprep.subr.mxu0 0.0
    %331 = vmatpush1.msra.mxu0 0.0
    %332 = vmatprep.subr.mxu0 0.0
    %333 = vmatpush1.msra.mxu0 0.0
    %334 = vmatprep.subr.mxu0 0.0
    %335 = vmatpush1.msra.mxu0 0.0
    %336 = vmatprep.subr.mxu0 0.0
    %337 = vmatpush1.msra.mxu0 0.0
    %338 = vmatprep.subr.mxu0 0.0
    %339 = vmatpush1.msra.mxu0 0.0
    %340 = vmatprep.subr.mxu0 0.0
    %341 = vmatpush1.msra.mxu0 0.0
    %342 = vmatprep.subr.mxu0 0.0
    %343 = vmatpush1.msra.mxu0 0.0
    %344 = vmatprep.subr.mxu0 0.0
    %345 = vmatpush1.msra.mxu0 0.0
    %346 = vmatprep.subr.mxu0 0.0
    %347 = vmatpush1.msra.mxu0 0.0
    %348 = vmatprep.subr.mxu0 0.0
    %349 = vmatpush1.msra.mxu0 0.0
    %350 = vmatprep.subr.mxu0 0.0
    %351 = vmatpush1.msra.mxu0 0.0
    %352 = vmatprep.subr.mxu0 0.0
    %353 = vmatpush1.msra.mxu0 0.0
    %354 = vmatprep.subr.mxu0 0.0
    %355 = vmatpush1.msra.mxu0 0.0
    %356 = vmatprep.subr.mxu0 0.0
    %357 = vmatpush1.msra.mxu0 0.0
    %358 = vmatprep.subr.mxu0 0.0
    %359 = vmatpush1.msra.mxu0 0.0
    %360 = vmatprep.subr.mxu0 0.0
    %361 = vmatpush1.msra.mxu0 0.0
    %362 = vmatprep.subr.mxu0 0.0
    %363 = vmatpush1.msra.mxu0 0.0
    %364 = vmatprep.subr.mxu0 0.0
    %365 = vmatpush1.msra.mxu0 0.0
    %366 = vmatprep.subr.mxu0 0.0
    %367 = vmatpush1.msra.mxu0 0.0
    %368 = vmatprep.mubr.f32.mxu0 0.0
    %369 = vmatmul.mubr.f32.gmra.mrb[0].mxu0 %v302
    %v370 = vpop.f32.mrb[0].mxu0
    %v371 = vadd.f32 %v289, %v370
    %v372 = vpop.f32.mrb[0].mxu0
    %373 = vdwg.mxu0
    %v374 = vadd.f32 %v371, %v204
    %vm375 = vcmp.gt.s32.totalorder %v27, 1
    %v376 = vtanh.pop %v374
    %v377 = vsel %vm375, 1, 0
    %378 = vset.pattern.permute.xlu0 0
    %379 = vperm.xlu0 %378, %v377
    %v380 = vpop.permute.xlu0 %379
    %vm381 = vcmp.eq.s32.totalorder %v380, 1
    %v382 = vsel %vm381, %v376, %v214
    %v383 = vld [vmem:[%s1 + $0x2] sm:$0x1]
    %v384 = vld [vmem:[%s1 + $0x12] sm:$0x1]
    %v385 = vld [vmem:[%s1 + $0x22] sm:$0x1]
    %v386 = vld [vmem:[%s1 + $0x32] sm:$0x1]
    %v388 = vsel %vm41, %v382, 0
    %390 = vmatprep.subr.mxu0 0.0
    %391 = vmatpush1.msra.mxu0 %v32
    %392 = vmatprep.subr.mxu0 0.0
    %393 = vmatpush1.msra.mxu0 %v33
    %394 = vmatprep.subr.mxu0 0.0
    %395 = vmatpush1.msra.mxu0 %v34
    %396 = vmatprep.subr.mxu0 0.0
    %397 = vmatpush1.msra.mxu0 %v35
    %398 = vmatprep.subr.mxu0 0.0
    %399 = vmatpush1.msra.mxu0 0.0
    %400 = vmatprep.subr.mxu0 0.0
    %401 = vmatpush1.msra.mxu0 0.0
    %402 = vmatprep.subr.mxu0 0.0
    %403 = vmatpush1.msra.mxu0 0.0
    %404 = vmatprep.subr.mxu0 0.0
    %405 = vmatpush1.msra.mxu0 0.0
    %406 = vmatprep.subr.mxu0 0.0
    %407 = vmatpush1.msra.mxu0 0.0
    %408 = vmatprep.subr.mxu0 0.0
    %409 = vmatpush1.msra.mxu0 0.0
    %410 = vmatprep.subr.mxu0 0.0
    %411 = vmatpush1.msra.mxu0 0.0
    %412 = vmatprep.subr.mxu0 0.0
    %413 = vmatpush1.msra.mxu0 0.0
    %414 = vmatprep.subr.mxu0 0.0
    %415 = vmatpush1.msra.mxu0 0.0
    %416 = vmatprep.subr.mxu0 0.0
    %417 = vmatpush1.msra.mxu0 0.0
    %418 = vmatprep.subr.mxu0 0.0
    %419 = vmatpush1.msra.mxu0 0.0
    %420 = vmatprep.subr.mxu0 0.0
    %421 = vmatpush1.msra.mxu0 0.0
    %422 = vmatprep.subr.mxu0 0.0
    %423 = vmatpush1.msra.mxu0 0.0
    %424 = vmatprep.subr.mxu0 0.0
    %425 = vmatpush1.msra.mxu0 0.0
    %426 = vmatprep.subr.mxu0 0.0
    %427 = vmatpush1.msra.mxu0 0.0
    %428 = vmatprep.subr.mxu0 0.0
    %429 = vmatpush1.msra.mxu0 0.0
    %430 = vmatprep.subr.mxu0 0.0
    %431 = vmatpush1.msra.mxu0 0.0
    %432 = vmatprep.subr.mxu0 0.0
    %433 = vmatpush1.msra.mxu0 0.0
    %434 = vmatprep.subr.mxu0 0.0
    %435 = vmatpush1.msra.mxu0 0.0
    %436 = vmatprep.subr.mxu0 0.0
    %437 = vmatpush1.msra.mxu0 0.0
    %438 = vmatprep.subr.mxu0 0.0
    %439 = vmatpush1.msra.mxu0 0.0
    %440 = vmatprep.subr.mxu0 0.0
    %441 = vmatpush1.msra.mxu0 0.0
    %442 = vmatprep.subr.mxu0 0.0
    %443 = vmatpush1.msra.mxu0 0.0
    %444 = vmatprep.subr.mxu0 0.0
    %445 = vmatpush1.msra.mxu0 0.0
    %446 = vmatprep.subr.mxu0 0.0
    %447 = vmatpush1.msra.mxu0 0.0
    %448 = vmatprep.subr.mxu0 0.0
    %449 = vmatpush1.msra.mxu0 0.0
    %450 = vmatprep.subr.mxu0 0.0
    %451 = vmatpush1.msra.mxu0 0.0
    %452 = vmatprep.subr.mxu0 0.0
    %453 = vmatpush1.msra.mxu0 0.0
    %454 = vmatprep.mubr.f32.mxu0 0.0
    %455 = vmatmul.mubr.f32.gmra.mrb[0].mxu0 %v388
    %v456 = vpop.f32.mrb[0].mxu0
    %v457 = vadd.f32 0.0, %v456
    %v458 = vpop.f32.mrb[0].mxu0
    %459 = vdwg.mxu0
    %v464 = vrot.slane %v384, 7
    %v465 = vsel %vm120, %v464, %v383
    %v466 = vrot.slane %v385, 6
    %v467 = vsel %vm123, %v466, %v465
    %v468 = vrot.slane %v386, 5
    %v469 = vsel %vm126, %v468, %v467
    %v470 = vsel %vm41, %v469, 0
    %472 = vmatprep.subr.mxu0 0.0
    %473 = vmatpush1.msra.mxu0 %v28
    %474 = vmatprep.subr.mxu0 0.0
    %475 = vmatpush1.msra.mxu0 %v29
    %476 = vmatprep.subr.mxu0 0.0
    %477 = vmatpush1.msra.mxu0 %v30
    %478 = vmatprep.subr.mxu0 0.0
    %479 = vmatpush1.msra.mxu0 %v31
    %480 = vmatprep.subr.mxu0 0.0
    %481 = vmatpush1.msra.mxu0 0.0
    %482 = vmatprep.subr.mxu0 0.0
    %483 = vmatpush1.msra.mxu0 0.0
    %484 = vmatprep.subr.mxu0 0.0
    %485 = vmatpush1.msra.mxu0 0.0
    %486 = vmatprep.subr.mxu0 0.0
    %487 = vmatpush1.msra.mxu0 0.0
    %488 = vmatprep.subr.mxu0 0.0
    %489 = vmatpush1.msra.mxu0 0.0
    %490 = vmatprep.subr.mxu0 0.0
    %491 = vmatpush1.msra.mxu0 0.0
    %492 = vmatprep.subr.mxu0 0.0
    %493 = vmatpush1.msra.mxu0 0.0
    %494 = vmatprep.subr.mxu0 0.0
    %495 = vmatpush1.msra.mxu0 0.0
    %496 = vmatprep.subr.mxu0 0.0
    %497 = vmatpush1.msra.mxu0 0.0
    %498 = vmatprep.subr.mxu0 0.0
    %499 = vmatpush1.msra.mxu0 0.0
    %500 = vmatprep.subr.mxu0 0.0
    %501 = vmatpush1.msra.mxu0 0.0
    %502 = vmatprep.subr.mxu0 0.0
    %503 = vmatpush1.msra.mxu0 0.0
    %504 = vmatprep.subr.mxu0 0.0
    %505 = vmatpush1.msra.mxu0 0.0
    %506 = vmatprep.subr.mxu0 0.0
    %507 = vmatpush1.msra.mxu0 0.0
    %508 = vmatprep.subr.mxu0 0.0
    %509 = vmatpush1.msra.mxu0 0.0
    %510 = vmatprep.subr.mxu0 0.0
    %511 = vmatpush1.msra.mxu0 0.0
    %512 = vmatprep.subr.mxu0 0.0
    %513 = vmatpush1.msra.mxu0 0.0
    %514 = vmatprep.subr.mxu0 0.0
    %515 = vmatpush1.msra.mxu0 0.0
    %516 = vmatprep.subr.mxu0 0.0
    %517 = vmatpush1.msra.mxu0 0.0
    %518 = vmatprep.subr.mxu0 0.0
    %519 = vmatpush1.msra.mxu0 0.0
    %520 = vmatprep.subr.mxu0 0.0
    %521 = vmatpush1.msra.mxu0 0.0
    %522 = vmatprep.subr.mxu0 0.0
    %523 = vmatpush1.msra.mxu0 0.0
    %524 = vmatprep.subr.mxu0 0.0
    %525 = vmatpush1.msra.mxu0 0.0
    %526 = vmatprep.subr.mxu0 0.0
    %527 = vmatpush1.msra.mxu0 0.0
    %528 = vmatprep.subr.mxu0 0.0
    %529 = vmatpush1.msra.mxu0 0.0
    %530 = vmatprep.subr.mxu0 0.0
    %531 = vmatpush1.msra.mxu0 0.0
    %532 = vmatprep.subr.mxu0 0.0
    %533 = vmatpush1.msra.mxu0 0.0
    %534 = vmatprep.subr.mxu0 0.0
    %535 = vmatpush1.msra.mxu0 0.0
    %536 = vmatprep.mubr.f32.mxu0 0.0
    %537 = vmatmul.mubr.f32.gmra.mrb[0].mxu0 %v470
    %v538 = vpop.f32.mrb[0].mxu0
    %v539 = vadd.f32 %v457, %v538
    %v540 = vpop.f32.mrb[0].mxu0
    %541 = vdwg.mxu0
    %v542 = vadd.f32 %v539, %v204
    %vm543 = vcmp.gt.s32.totalorder %v27, 2
    %v544 = vtanh.pop %v542
    %v545 = vsel %vm543, 1, 0
    %546 = vset.pattern.permute.xlu0 0
    %547 = vperm.xlu0 %546, %v545
    %v548 = vpop.permute.xlu0 %547
    %vm549 = vcmp.eq.s32.totalorder %v548, 1
    %v550 = vsel %vm549, %v544, %v382
    %v551 = vld [vmem:[%s1 + $0x3] sm:$0x1]
    %v552 = vld [vmem:[%s1 + $0x13] sm:$0x1]
    %v553 = vld [vmem:[%s1 + $0x23] sm:$0x1]
    %v554 = vld [vmem:[%s1 + $0x33] sm:$0x1]
    %v556 = vsel %vm41, %v550, 0
    %558 = vmatprep.subr.mxu0 0.0
    %559 = vmatpush1.msra.mxu0 %v32
    %560 = vmatprep.subr.mxu0 0.0
    %561 = vmatpush1.msra.mxu0 %v33
    %562 = vmatprep.subr.mxu0 0.0
    %563 = vmatpush1.msra.mxu0 %v34
    %564 = vmatprep.subr.mxu0 0.0
    %565 = vmatpush1.msra.mxu0 %v35
    %566 = vmatprep.subr.mxu0 0.0
    %567 = vmatpush1.msra.mxu0 0.0
    %568 = vmatprep.subr.mxu0 0.0
    %569 = vmatpush1.msra.mxu0 0.0
    %570 = vmatprep.subr.mxu0 0.0
    %571 = vmatpush1.msra.mxu0 0.0
    %572 = vmatprep.subr.mxu0 0.0
    %573 = vmatpush1.msra.mxu0 0.0
    %574 = vmatprep.subr.mxu0 0.0
    %575 = vmatpush1.msra.mxu0 0.0
    %576 = vmatprep.subr.mxu0 0.0
    %577 = vmatpush1.msra.mxu0 0.0
    %578 = vmatprep.subr.mxu0 0.0
    %579 = vmatpush1.msra.mxu0 0.0
    %580 = vmatprep.subr.mxu0 0.0
    %581 = vmatpush1.msra.mxu0 0.0
    %582 = vmatprep.subr.mxu0 0.0
    %583 = vmatpush1.msra.mxu0 0.0
    %584 = vmatprep.subr.mxu0 0.0
    %585 = vmatpush1.msra.mxu0 0.0
    %586 = vmatprep.subr.mxu0 0.0
    %587 = vmatpush1.msra.mxu0 0.0
    %588 = vmatprep.subr.mxu0 0.0
    %589 = vmatpush1.msra.mxu0 0.0
    %590 = vmatprep.subr.mxu0 0.0
    %591 = vmatpush1.msra.mxu0 0.0
    %592 = vmatprep.subr.mxu0 0.0
    %593 = vmatpush1.msra.mxu0 0.0
    %594 = vmatprep.subr.mxu0 0.0
    %595 = vmatpush1.msra.mxu0 0.0
    %596 = vmatprep.subr.mxu0 0.0
    %597 = vmatpush1.msra.mxu0 0.0
    %598 = vmatprep.subr.mxu0 0.0
    %599 = vmatpush1.msra.mxu0 0.0
    %600 = vmatprep.subr.mxu0 0.0
    %601 = vmatpush1.msra.mxu0 0.0
    %602 = vmatprep.subr.mxu0 0.0
    %603 = vmatpush1.msra.mxu0 0.0
    %604 = vmatprep.subr.mxu0 0.0
    %605 = vmatpush1.msra.mxu0 0.0
    %606 = vmatprep.subr.mxu0 0.0
    %607 = vmatpush1.msra.mxu0 0.0
    %608 = vmatprep.subr.mxu0 0.0
    %609 = vmatpush1.msra.mxu0 0.0
    %610 = vmatprep.subr.mxu0 0.0
    %611 = vmatpush1.msra.mxu0 0.0
    %612 = vmatprep.subr.mxu0 0.0
    %613 = vmatpush1.msra.mxu0 0.0
    %614 = vmatprep.subr.mxu0 0.0
    %615 = vmatpush1.msra.mxu0 0.0
    %616 = vmatprep.subr.mxu0 0.0
    %617 = vmatpush1.msra.mxu0 0.0
    %618 = vmatprep.subr.mxu0 0.0
    %619 = vmatpush1.msra.mxu0 0.0
    %620 = vmatprep.subr.mxu0 0.0
    %621 = vmatpush1.msra.mxu0 0.0
    %622 = vmatprep.mubr.f32.mxu0 0.0
    %623 = vmatmul.mubr.f32.gmra.mrb[0].mxu0 %v556
    %v624 = vpop.f32.mrb[0].mxu0
    %v625 = vadd.f32 0.0, %v624
    %v626 = vpop.f32.mrb[0].mxu0
    %627 = vdwg.mxu0
    %v632 = vrot.slane %v552, 7
    %v633 = vsel %vm120, %v632, %v551
    %v634 = vrot.slane %v553, 6
    %v635 = vsel %vm123, %v634, %v633
    %v636 = vrot.slane %v554, 5
    %v637 = vsel %vm126, %v636, %v635
    %v638 = vsel %vm41, %v637, 0
    %640 = vmatprep.subr.mxu0 0.0
    %641 = vmatpush1.msra.mxu0 %v28
    %642 = vmatprep.subr.mxu0 0.0
    %643 = vmatpush1.msra.mxu0 %v29
    %644 = vmatprep.subr.mxu0 0.0
    %645 = vmatpush1.msra.mxu0 %v30
    %646 = vmatprep.subr.mxu0 0.0
    %647 = vmatpush1.msra.mxu0 %v31
    %648 = vmatprep.subr.mxu0 0.0
    %649 = vmatpush1.msra.mxu0 0.0
    %650 = vmatprep.subr.mxu0 0.0
    %651 = vmatpush1.msra.mxu0 0.0
    %652 = vmatprep.subr.mxu0 0.0
    %653 = vmatpush1.msra.mxu0 0.0
    %654 = vmatprep.subr.mxu0 0.0
    %655 = vmatpush1.msra.mxu0 0.0
    %656 = vmatprep.subr.mxu0 0.0
    %657 = vmatpush1.msra.mxu0 0.0
    %658 = vmatprep.subr.mxu0 0.0
    %659 = vmatpush1.msra.mxu0 0.0
    %660 = vmatprep.subr.mxu0 0.0
    %661 = vmatpush1.msra.mxu0 0.0
    %662 = vmatprep.subr.mxu0 0.0
    %663 = vmatpush1.msra.mxu0 0.0
    %664 = vmatprep.subr.mxu0 0.0
    %665 = vmatpush1.msra.mxu0 0.0
    %666 = vmatprep.subr.mxu0 0.0
    %667 = vmatpush1.msra.mxu0 0.0
    %668 = vmatprep.subr.mxu0 0.0
    %669 = vmatpush1.msra.mxu0 0.0
    %670 = vmatprep.subr.mxu0 0.0
    %671 = vmatpush1.msra.mxu0 0.0
    %672 = vmatprep.subr.mxu0 0.0
    %673 = vmatpush1.msra.mxu0 0.0
    %674 = vmatprep.subr.mxu0 0.0
    %675 = vmatpush1.msra.mxu0 0.0
    %676 = vmatprep.subr.mxu0 0.0
    %677 = vmatpush1.msra.mxu0 0.0
    %678 = vmatprep.subr.mxu0 0.0
    %679 = vmatpush1.msra.mxu0 0.0
    %680 = vmatprep.subr.mxu0 0.0
    %681 = vmatpush1.msra.mxu0 0.0
    %682 = vmatprep.subr.mxu0 0.0
    %683 = vmatpush1.msra.mxu0 0.0
    %684 = vmatprep.subr.mxu0 0.0
    %685 = vmatpush1.msra.mxu0 0.0
    %686 = vmatprep.subr.mxu0 0.0
    %687 = vmatpush1.msra.mxu0 0.0
    %688 = vmatprep.subr.mxu0 0.0
    %689 = vmatpush1.msra.mxu0 0.0
    %690 = vmatprep.subr.mxu0 0.0
    %691 = vmatpush1.msra.mxu0 0.0
    %692 = vmatprep.subr.mxu0 0.0
    %693 = vmatpush1.msra.mxu0 0.0
    %694 = vmatprep.subr.mxu0 0.0
    %695 = vmatpush1.msra.mxu0 0.0
    %696 = vmatprep.subr.mxu0 0.0
    %697 = vmatpush1.msra.mxu0 0.0
    %698 = vmatprep.subr.mxu0 0.0
    %699 = vmatpush1.msra.mxu0 0.0
    %700 = vmatprep.subr.mxu0 0.0
    %701 = vmatpush1.msra.mxu0 0.0
    %702 = vmatprep.subr.mxu0 0.0
    %703 = vmatpush1.msra.mxu0 0.0
    %704 = vmatprep.mubr.f32.mxu0 0.0
    %705 = vmatmul.mubr.f32.gmra.mrb[0].mxu0 %v638
    %v706 = vpop.f32.mrb[0].mxu0
    %v707 = vadd.f32 %v625, %v706
    %v708 = vpop.f32.mrb[0].mxu0
    %709 = vdwg.mxu0
    %v710 = vadd.f32 %v707, %v204
    %vm711 = vcmp.gt.s32.totalorder %v27, 3
    %v712 = vtanh.pop %v710
    %v713 = vsel %vm711, 1, 0
    %714 = vset.pattern.permute.xlu0 0
    %715 = vperm.xlu0 %714, %v713
    %v716 = vpop.permute.xlu0 %715
    %vm717 = vcmp.eq.s32.totalorder %v716, 1
    %v718 = vsel %vm717, %v712, %v550
    %v719 = vld [vmem:[%s1 + $0x4] sm:$0x1]
    %v720 = vld [vmem:[%s1 + $0x14] sm:$0x1]
    %v721 = vld [vmem:[%s1 + $0x24] sm:$0x1]
    %v722 = vld [vmem:[%s1 + $0x34] sm:$0x1]
    %v724 = vsel %vm41, %v718, 0
    %726 = vmatprep.subr.mxu0 0.0
    %727 = vmatpush1.msra.mxu0 %v32
    %728 = vmatprep.subr.mxu0 0.0
    %729 = vmatpush1.msra.mxu0 %v33
    %730 = vmatprep.subr.mxu0 0.0
    %731 = vmatpush1.msra.mxu0 %v34
    %732 = vmatprep.subr.mxu0 0.0
    %733 = vmatpush1.msra.mxu0 %v35
    %734 = vmatprep.subr.mxu0 0.0
    %735 = vmatpush1.msra.mxu0 0.0
    %736 = vmatprep.subr.mxu0 0.0
    %737 = vmatpush1.msra.mxu0 0.0
    %738 = vmatprep.subr.mxu0 0.0
    %739 = vmatpush1.msra.mxu0 0.0
    %740 = vmatprep.subr.mxu0 0.0
    %741 = vmatpush1.msra.mxu0 0.0
    %742 = vmatprep.subr.mxu0 0.0
    %743 = vmatpush1.msra.mxu0 0.0
    %744 = vmatprep.subr.mxu0 0.0
    %745 = vmatpush1.msra.mxu0 0.0
    %746 = vmatprep.subr.mxu0 0.0
    %747 = vmatpush1.msra.mxu0 0.0
    %748 = vmatprep.subr.mxu0 0.0
    %749 = vmatpush1.msra.mxu0 0.0
    %750 = vmatprep.subr.mxu0 0.0
    %751 = vmatpush1.msra.mxu0 0.0
    %752 = vmatprep.subr.mxu0 0.0
    %753 = vmatpush1.msra.mxu0 0.0
    %754 = vmatprep.subr.mxu0 0.0
    %755 = vmatpush1.msra.mxu0 0.0
    %756 = vmatprep.subr.mxu0 0.0
    %757 = vmatpush1.msra.mxu0 0.0
    %758 = vmatprep.subr.mxu0 0.0
    %759 = vmatpush1.msra.mxu0 0.0
    %760 = vmatprep.subr.mxu0 0.0
    %761 = vmatpush1.msra.mxu0 0.0
    %762 = vmatprep.subr.mxu0 0.0
    %763 = vmatpush1.msra.mxu0 0.0
    %764 = vmatprep.subr.mxu0 0.0
    %765 = vmatpush1.msra.mxu0 0.0
    %766 = vmatprep.subr.mxu0 0.0
    %767 = vmatpush1.msra.mxu0 0.0
    %768 = vmatprep.subr.mxu0 0.0
    %769 = vmatpush1.msra.mxu0 0.0
    %770 = vmatprep.subr.mxu0 0.0
    %771 = vmatpush1.msra.mxu0 0.0
    %772 = vmatprep.subr.mxu0 0.0
    %773 = vmatpush1.msra.mxu0 0.0
    %774 = vmatprep.subr.mxu0 0.0
    %775 = vmatpush1.msra.mxu0 0.0
    %776 = vmatprep.subr.mxu0 0.0
    %777 = vmatpush1.msra.mxu0 0.0
    %778 = vmatprep.subr.mxu0 0.0
    %779 = vmatpush1.msra.mxu0 0.0
    %780 = vmatprep.subr.mxu0 0.0
    %781 = vmatpush1.msra.mxu0 0.0
    %782 = vmatprep.subr.mxu0 0.0
    %783 = vmatpush1.msra.mxu0 0.0
    %784 = vmatprep.subr.mxu0 0.0
    %785 = vmatpush1.msra.mxu0 0.0
    %786 = vmatprep.subr.mxu0 0.0
    %787 = vmatpush1.msra.mxu0 0.0
    %788 = vmatprep.subr.mxu0 0.0
    %789 = vmatpush1.msra.mxu0 0.0
    %790 = vmatprep.mubr.f32.mxu0 0.0
    %791 = vmatmul.mubr.f32.gmra.mrb[0].mxu0 %v724
    %v792 = vpop.f32.mrb[0].mxu0
    %v793 = vadd.f32 0.0, %v792
    %v794 = vpop.f32.mrb[0].mxu0
    %795 = vdwg.mxu0
    %v800 = vrot.slane %v720, 7
    %v801 = vsel %vm120, %v800, %v719
    %v802 = vrot.slane %v721, 6
    %v803 = vsel %vm123, %v802, %v801
    %v804 = vrot.slane %v722, 5
    %v805 = vsel %vm126, %v804, %v803
    %v806 = vsel %vm41, %v805, 0
    %808 = vmatprep.subr.mxu0 0.0
    %809 = vmatpush1.msra.mxu0 %v28
    %810 = vmatprep.subr.mxu0 0.0
    %811 = vmatpush1.msra.mxu0 %v29
    %812 = vmatprep.subr.mxu0 0.0
    %813 = vmatpush1.msra.mxu0 %v30
    %814 = vmatprep.subr.mxu0 0.0
    %815 = vmatpush1.msra.mxu0 %v31
    %816 = vmatprep.subr.mxu0 0.0
    %817 = vmatpush1.msra.mxu0 0.0
    %818 = vmatprep.subr.mxu0 0.0
    %819 = vmatpush1.msra.mxu0 0.0
    %820 = vmatprep.subr.mxu0 0.0
    %821 = vmatpush1.msra.mxu0 0.0
    %822 = vmatprep.subr.mxu0 0.0
    %823 = vmatpush1.msra.mxu0 0.0
    %824 = vmatprep.subr.mxu0 0.0
    %825 = vmatpush1.msra.mxu0 0.0
    %826 = vmatprep.subr.mxu0 0.0
    %827 = vmatpush1.msra.mxu0 0.0
    %828 = vmatprep.subr.mxu0 0.0
    %829 = vmatpush1.msra.mxu0 0.0
    %830 = vmatprep.subr.mxu0 0.0
    %831 = vmatpush1.msra.mxu0 0.0
    %832 = vmatprep.subr.mxu0 0.0
    %833 = vmatpush1.msra.mxu0 0.0
    %834 = vmatprep.subr.mxu0 0.0
    %835 = vmatpush1.msra.mxu0 0.0
    %836 = vmatprep.subr.mxu0 0.0
    %837 = vmatpush1.msra.mxu0 0.0
    %838 = vmatprep.subr.mxu0 0.0
    %839 = vmatpush1.msra.mxu0 0.0
    %840 = vmatprep.subr.mxu0 0.0
    %841 = vmatpush1.msra.mxu0 0.0
    %842 = vmatprep.subr.mxu0 0.0
    %843 = vmatpush1.msra.mxu0 0.0
    %844 = vmatprep.subr.mxu0 0.0
    %845 = vmatpush1.msra.mxu0 0.0
    %846 = vmatprep.subr.mxu0 0.0
    %847 = vmatpush1.msra.mxu0 0.0
    %848 = vmatprep.subr.mxu0 0.0
    %849 = vmatpush1.msra.mxu0 0.0
    %850 = vmatprep.subr.mxu0 0.0
    %851 = vmatpush1.msra.mxu0 0.0
    %852 = vmatprep.subr.mxu0 0.0
    %853 = vmatpush1.msra.mxu0 0.0
    %854 = vmatprep.subr.mxu0 0.0
    %855 = vmatpush1.msra.mxu0 0.0
    %856 = vmatprep.subr.mxu0 0.0
    %857 = vmatpush1.msra.mxu0 0.0
    %858 = vmatprep.subr.mxu0 0.0
    %859 = vmatpush1.msra.mxu0 0.0
    %860 = vmatprep.subr.mxu0 0.0
    %861 = vmatpush1.msra.mxu0 0.0
    %862 = vmatprep.subr.mxu0 0.0
    %863 = vmatpush1.msra.mxu0 0.0
    %864 = vmatprep.subr.mxu0 0.0
    %865 = vmatpush1.msra.mxu0 0.0
    %866 = vmatprep.subr.mxu0 0.0
    %867 = vmatpush1.msra.mxu0 0.0
    %868 = vmatprep.subr.mxu0 0.0
    %869 = vmatpush1.msra.mxu0 0.0
    %870 = vmatprep.subr.mxu0 0.0
    %871 = vmatpush1.msra.mxu0 0.0
    %872 = vmatprep.mubr.f32.mxu0 0.0
    %873 = vmatmul.mubr.f32.gmra.mrb[0].mxu0 %v806
    %v874 = vpop.f32.mrb[0].mxu0
    %v875 = vadd.f32 %v793, %v874
    %v876 = vpop.f32.mrb[0].mxu0
    %877 = vdwg.mxu0
    %v878 = vadd.f32 %v875, %v204
    %vm879 = vcmp.gt.s32.totalorder %v27, 4
    %v880 = vtanh.pop %v878
    %v881 = vsel %vm879, 1, 0
    %882 = vset.pattern.permute.xlu0 0
    %883 = vperm.xlu0 %882, %v881
    %v884 = vpop.permute.xlu0 %883
    %vm885 = vcmp.eq.s32.totalorder %v884, 1
    %v886 = vsel %vm885, %v880, %v718
    %v887 = vld [vmem:[%s1 + $0x5] sm:$0x1]
    %v888 = vld [vmem:[%s1 + $0x15] sm:$0x1]
    %v889 = vld [vmem:[%s1 + $0x25] sm:$0x1]
    %v890 = vld [vmem:[%s1 + $0x35] sm:$0x1]
    %v892 = vsel %vm41, %v886, 0
    %894 = vmatprep.subr.mxu0 0.0
    %895 = vmatpush1.msra.mxu0 %v32
    %896 = vmatprep.subr.mxu0 0.0
    %897 = vmatpush1.msra.mxu0 %v33
    %898 = vmatprep.subr.mxu0 0.0
    %899 = vmatpush1.msra.mxu0 %v34
    %900 = vmatprep.subr.mxu0 0.0
    %901 = vmatpush1.msra.mxu0 %v35
    %902 = vmatprep.subr.mxu0 0.0
    %903 = vmatpush1.msra.mxu0 0.0
    %904 = vmatprep.subr.mxu0 0.0
    %905 = vmatpush1.msra.mxu0 0.0
    %906 = vmatprep.subr.mxu0 0.0
    %907 = vmatpush1.msra.mxu0 0.0
    %908 = vmatprep.subr.mxu0 0.0
    %909 = vmatpush1.msra.mxu0 0.0
    %910 = vmatprep.subr.mxu0 0.0
    %911 = vmatpush1.msra.mxu0 0.0
    %912 = vmatprep.subr.mxu0 0.0
    %913 = vmatpush1.msra.mxu0 0.0
    %914 = vmatprep.subr.mxu0 0.0
    %915 = vmatpush1.msra.mxu0 0.0
    %916 = vmatprep.subr.mxu0 0.0
    %917 = vmatpush1.msra.mxu0 0.0
    %918 = vmatprep.subr.mxu0 0.0
    %919 = vmatpush1.msra.mxu0 0.0
    %920 = vmatprep.subr.mxu0 0.0
    %921 = vmatpush1.msra.mxu0 0.0
    %922 = vmatprep.subr.mxu0 0.0
    %923 = vmatpush1.msra.mxu0 0.0
    %924 = vmatprep.subr.mxu0 0.0
    %925 = vmatpush1.msra.mxu0 0.0
    %926 = vmatprep.subr.mxu0 0.0
    %927 = vmatpush1.msra.mxu0 0.0
    %928 = vmatprep.subr.mxu0 0.0
    %929 = vmatpush1.msra.mxu0 0.0
    %930 = vmatprep.subr.mxu0 0.0
    %931 = vmatpush1.msra.mxu0 0.0
    %932 = vmatprep.subr.mxu0 0.0
    %933 = vmatpush1.msra.mxu0 0.0
    %934 = vmatprep.subr.mxu0 0.0
    %935 = vmatpush1.msra.mxu0 0.0
    %936 = vmatprep.subr.mxu0 0.0
    %937 = vmatpush1.msra.mxu0 0.0
    %938 = vmatprep.subr.mxu0 0.0
    %939 = vmatpush1.msra.mxu0 0.0
    %940 = vmatprep.subr.mxu0 0.0
    %941 = vmatpush1.msra.mxu0 0.0
    %942 = vmatprep.subr.mxu0 0.0
    %943 = vmatpush1.msra.mxu0 0.0
    %944 = vmatprep.subr.mxu0 0.0
    %945 = vmatpush1.msra.mxu0 0.0
    %946 = vmatprep.subr.mxu0 0.0
    %947 = vmatpush1.msra.mxu0 0.0
    %948 = vmatprep.subr.mxu0 0.0
    %949 = vmatpush1.msra.mxu0 0.0
    %950 = vmatprep.subr.mxu0 0.0
    %951 = vmatpush1.msra.mxu0 0.0
    %952 = vmatprep.subr.mxu0 0.0
    %953 = vmatpush1.msra.mxu0 0.0
    %954 = vmatprep.subr.mxu0 0.0
    %955 = vmatpush1.msra.mxu0 0.0
    %956 = vmatprep.subr.mxu0 0.0
    %957 = vmatpush1.msra.mxu0 0.0
    %958 = vmatprep.mubr.f32.mxu0 0.0
    %959 = vmatmul.mubr.f32.gmra.mrb[0].mxu0 %v892
    %v960 = vpop.f32.mrb[0].mxu0
    %v961 = vadd.f32 0.0, %v960
    %v962 = vpop.f32.mrb[0].mxu0
    %963 = vdwg.mxu0
    %v968 = vrot.slane %v888, 7
    %v969 = vsel %vm120, %v968, %v887
    %v970 = vrot.slane %v889, 6
    %v971 = vsel %vm123, %v970, %v969
    %v972 = vrot.slane %v890, 5
    %v973 = vsel %vm126, %v972, %v971
    %v974 = vsel %vm41, %v973, 0
    %976 = vmatprep.subr.mxu0 0.0
    %977 = vmatpush1.msra.mxu0 %v28
    %978 = vmatprep.subr.mxu0 0.0
    %979 = vmatpush1.msra.mxu0 %v29
    %980 = vmatprep.subr.mxu0 0.0
    %981 = vmatpush1.msra.mxu0 %v30
    %982 = vmatprep.subr.mxu0 0.0
    %983 = vmatpush1.msra.mxu0 %v31
    %984 = vmatprep.subr.mxu0 0.0
    %985 = vmatpush1.msra.mxu0 0.0
    %986 = vmatprep.subr.mxu0 0.0
    %987 = vmatpush1.msra.mxu0 0.0
    %988 = vmatprep.subr.mxu0 0.0
    %989 = vmatpush1.msra.mxu0 0.0
    %990 = vmatprep.subr.mxu0 0.0
    %991 = vmatpush1.msra.mxu0 0.0
    %992 = vmatprep.subr.mxu0 0.0
    %993 = vmatpush1.msra.mxu0 0.0
    %994 = vmatprep.subr.mxu0 0.0
    %995 = vmatpush1.msra.mxu0 0.0
    %996 = vmatprep.subr.mxu0 0.0
    %997 = vmatpush1.msra.mxu0 0.0
    %998 = vmatprep.subr.mxu0 0.0
    %999 = vmatpush1.msra.mxu0 0.0
    %1000 = vmatprep.subr.mxu0 0.0
    %1001 = vmatpush1.msra.mxu0 0.0
    %1002 = vmatprep.subr.mxu0 0.0
    %1003 = vmatpush1.msra.mxu0 0.0
    %1004 = vmatprep.subr.mxu0 0.0
    %1005 = vmatpush1.msra.mxu0 0.0
    %1006 = vmatprep.subr.mxu0 0.0
    %1007 = vmatpush1.msra.mxu0 0.0
    %1008 = vmatprep.subr.mxu0 0.0
    %1009 = vmatpush1.msra.mxu0 0.0
    %1010 = vmatprep.subr.mxu0 0.0
    %1011 = vmatpush1.msra.mxu0 0.0
    %1012 = vmatprep.subr.mxu0 0.0
    %1013 = vmatpush1.msra.mxu0 0.0
    %1014 = vmatprep.subr.mxu0 0.0
    %1015 = vmatpush1.msra.mxu0 0.0
    %1016 = vmatprep.subr.mxu0 0.0
    %1017 = vmatpush1.msra.mxu0 0.0
    %1018 = vmatprep.subr.mxu0 0.0
    %1019 = vmatpush1.msra.mxu0 0.0
    %1020 = vmatprep.subr.mxu0 0.0
    %1021 = vmatpush1.msra.mxu0 0.0
    %1022 = vmatprep.subr.mxu0 0.0
    %1023 = vmatpush1.msra.mxu0 0.0
    %1024 = vmatprep.subr.mxu0 0.0
    %1025 = vmatpush1.msra.mxu0 0.0
    %1026 = vmatprep.subr.mxu0 0.0
    %1027 = vmatpush1.msra.mxu0 0.0
    %1028 = vmatprep.subr.mxu0 0.0
    %1029 = vmatpush1.msra.mxu0 0.0
    %1030 = vmatprep.subr.mxu0 0.0
    %1031 = vmatpush1.msra.mxu0 0.0
    %1032 = vmatprep.subr.mxu0 0.0
    %1033 = vmatpush1.msra.mxu0 0.0
    %1034 = vmatprep.subr.mxu0 0.0
    %1035 = vmatpush1.msra.mxu0 0.0
    %1036 = vmatprep.subr.mxu0 0.0
    %1037 = vmatpush1.msra.mxu0 0.0
    %1038 = vmatprep.subr.mxu0 0.0
    %1039 = vmatpush1.msra.mxu0 0.0
    %1040 = vmatprep.mubr.f32.mxu0 0.0
    %1041 = vmatmul.mubr.f32.gmra.mrb[0].mxu0 %v974
    %v1042 = vpop.f32.mrb[0].mxu0
    %v1043 = vadd.f32 %v961, %v1042
    %v1044 = vpop.f32.mrb[0].mxu0
    %1045 = vdwg.mxu0
    %v1046 = vadd.f32 %v1043, %v204
    %vm1047 = vcmp.gt.s32.totalorder %v27, 5
    %v1048 = vtanh.pop %v1046
    %v1049 = vsel %vm1047, 1, 0
    %1050 = vset.pattern.permute.xlu0 0
    %1051 = vperm.xlu0 %1050, %v1049
    %v1052 = vpop.permute.xlu0 %1051
    %vm1053 = vcmp.eq.s32.totalorder %v1052, 1
    %v1054 = vsel %vm1053, %v1048, %v886
    %v1055 = vld [vmem:[%s1 + $0x6] sm:$0x1]
    %v1056 = vld [vmem:[%s1 + $0x16] sm:$0x1]
    %v1057 = vld [vmem:[%s1 + $0x26] sm:$0x1]
    %v1058 = vld [vmem:[%s1 + $0x36] sm:$0x1]
    %v1060 = vsel %vm41, %v1054, 0
    %1062 = vmatprep.subr.mxu0 0.0
    %1063 = vmatpush1.msra.mxu0 %v32
    %1064 = vmatprep.subr.mxu0 0.0
    %1065 = vmatpush1.msra.mxu0 %v33
    %1066 = vmatprep.subr.mxu0 0.0
    %1067 = vmatpush1.msra.mxu0 %v34
    %1068 = vmatprep.subr.mxu0 0.0
    %1069 = vmatpush1.msra.mxu0 %v35
    %1070 = vmatprep.subr.mxu0 0.0
    %1071 = vmatpush1.msra.mxu0 0.0
    %1072 = vmatprep.subr.mxu0 0.0
    %1073 = vmatpush1.msra.mxu0 0.0
    %1074 = vmatprep.subr.mxu0 0.0
    %1075 = vmatpush1.msra.mxu0 0.0
    %1076 = vmatprep.subr.mxu0 0.0
    %1077 = vmatpush1.msra.mxu0 0.0
    %1078 = vmatprep.subr.mxu0 0.0
    %1079 = vmatpush1.msra.mxu0 0.0
    %1080 = vmatprep.subr.mxu0 0.0
    %1081 = vmatpush1.msra.mxu0 0.0
    %1082 = vmatprep.subr.mxu0 0.0
    %1083 = vmatpush1.msra.mxu0 0.0
    %1084 = vmatprep.subr.mxu0 0.0
    %1085 = vmatpush1.msra.mxu0 0.0
    %1086 = vmatprep.subr.mxu0 0.0
    %1087 = vmatpush1.msra.mxu0 0.0
    %1088 = vmatprep.subr.mxu0 0.0
    %1089 = vmatpush1.msra.mxu0 0.0
    %1090 = vmatprep.subr.mxu0 0.0
    %1091 = vmatpush1.msra.mxu0 0.0
    %1092 = vmatprep.subr.mxu0 0.0
    %1093 = vmatpush1.msra.mxu0 0.0
    %1094 = vmatprep.subr.mxu0 0.0
    %1095 = vmatpush1.msra.mxu0 0.0
    %1096 = vmatprep.subr.mxu0 0.0
    %1097 = vmatpush1.msra.mxu0 0.0
    %1098 = vmatprep.subr.mxu0 0.0
    %1099 = vmatpush1.msra.mxu0 0.0
    %1100 = vmatprep.subr.mxu0 0.0
    %1101 = vmatpush1.msra.mxu0 0.0
    %1102 = vmatprep.subr.mxu0 0.0
    %1103 = vmatpush1.msra.mxu0 0.0
    %1104 = vmatprep.subr.mxu0 0.0
    %1105 = vmatpush1.msra.mxu0 0.0
    %1106 = vmatprep.subr.mxu0 0.0
    %1107 = vmatpush1.msra.mxu0 0.0
    %1108 = vmatprep.subr.mxu0 0.0
    %1109 = vmatpush1.msra.mxu0 0.0
    %1110 = vmatprep.subr.mxu0 0.0
    %1111 = vmatpush1.msra.mxu0 0.0
    %1112 = vmatprep.subr.mxu0 0.0
    %1113 = vmatpush1.msra.mxu0 0.0
    %1114 = vmatprep.subr.mxu0 0.0
    %1115 = vmatpush1.msra.mxu0 0.0
    %1116 = vmatprep.subr.mxu0 0.0
    %1117 = vmatpush1.msra.mxu0 0.0
    %1118 = vmatprep.subr.mxu0 0.0
    %1119 = vmatpush1.msra.mxu0 0.0
    %1120 = vmatprep.subr.mxu0 0.0
    %1121 = vmatpush1.msra.mxu0 0.0
    %1122 = vmatprep.subr.mxu0 0.0
    %1123 = vmatpush1.msra.mxu0 0.0
    %1124 = vmatprep.subr.mxu0 0.0
    %1125 = vmatpush1.msra.mxu0 0.0
    %1126 = vmatprep.mubr.f32.mxu0 0.0
    %1127 = vmatmul.mubr.f32.gmra.mrb[0].mxu0 %v1060
    %v1128 = vpop.f32.mrb[0].mxu0
    %v1129 = vadd.f32 0.0, %v1128
    %v1130 = vpop.f32.mrb[0].mxu0
    %1131 = vdwg.mxu0
    %v1136 = vrot.slane %v1056, 7
    %v1137 = vsel %vm120, %v1136, %v1055
    %v1138 = vrot.slane %v1057, 6
    %v1139 = vsel %vm123, %v1138, %v1137
    %v1140 = vrot.slane %v1058, 5
    %v1141 = vsel %vm126, %v1140, %v1139
    %v1142 = vsel %vm41, %v1141, 0
    %1144 = vmatprep.subr.mxu0 0.0
    %1145 = vmatpush1.msra.mxu0 %v28
    %1146 = vmatprep.subr.mxu0 0.0
    %1147 = vmatpush1.msra.mxu0 %v29
    %1148 = vmatprep.subr.mxu0 0.0
    %1149 = vmatpush1.msra.mxu0 %v30
    %1150 = vmatprep.subr.mxu0 0.0
    %1151 = vmatpush1.msra.mxu0 %v31
    %1152 = vmatprep.subr.mxu0 0.0
    %1153 = vmatpush1.msra.mxu0 0.0
    %1154 = vmatprep.subr.mxu0 0.0
    %1155 = vmatpush1.msra.mxu0 0.0
    %1156 = vmatprep.subr.mxu0 0.0
    %1157 = vmatpush1.msra.mxu0 0.0
    %1158 = vmatprep.subr.mxu0 0.0
    %1159 = vmatpush1.msra.mxu0 0.0
    %1160 = vmatprep.subr.mxu0 0.0
    %1161 = vmatpush1.msra.mxu0 0.0
    %1162 = vmatprep.subr.mxu0 0.0
    %1163 = vmatpush1.msra.mxu0 0.0
    %1164 = vmatprep.subr.mxu0 0.0
    %1165 = vmatpush1.msra.mxu0 0.0
    %1166 = vmatprep.subr.mxu0 0.0
    %1167 = vmatpush1.msra.mxu0 0.0
    %1168 = vmatprep.subr.mxu0 0.0
    %1169 = vmatpush1.msra.mxu0 0.0
    %1170 = vmatprep.subr.mxu0 0.0
    %1171 = vmatpush1.msra.mxu0 0.0
    %1172 = vmatprep.subr.mxu0 0.0
    %1173 = vmatpush1.msra.mxu0 0.0
    %1174 = vmatprep.subr.mxu0 0.0
    %1175 = vmatpush1.msra.mxu0 0.0
    %1176 = vmatprep.subr.mxu0 0.0
    %1177 = vmatpush1.msra.mxu0 0.0
    %1178 = vmatprep.subr.mxu0 0.0
    %1179 = vmatpush1.msra.mxu0 0.0
    %1180 = vmatprep.subr.mxu0 0.0
    %1181 = vmatpush1.msra.mxu0 0.0
    %1182 = vmatprep.subr.mxu0 0.0
    %1183 = vmatpush1.msra.mxu0 0.0
    %1184 = vmatprep.subr.mxu0 0.0
    %1185 = vmatpush1.msra.mxu0 0.0
    %1186 = vmatprep.subr.mxu0 0.0
    %1187 = vmatpush1.msra.mxu0 0.0
    %1188 = vmatprep.subr.mxu0 0.0
    %1189 = vmatpush1.msra.mxu0 0.0
    %1190 = vmatprep.subr.mxu0 0.0
    %1191 = vmatpush1.msra.mxu0 0.0
    %1192 = vmatprep.subr.mxu0 0.0
    %1193 = vmatpush1.msra.mxu0 0.0
    %1194 = vmatprep.subr.mxu0 0.0
    %1195 = vmatpush1.msra.mxu0 0.0
    %1196 = vmatprep.subr.mxu0 0.0
    %1197 = vmatpush1.msra.mxu0 0.0
    %1198 = vmatprep.subr.mxu0 0.0
    %1199 = vmatpush1.msra.mxu0 0.0
    %1200 = vmatprep.subr.mxu0 0.0
    %1201 = vmatpush1.msra.mxu0 0.0
    %1202 = vmatprep.subr.mxu0 0.0
    %1203 = vmatpush1.msra.mxu0 0.0
    %1204 = vmatprep.subr.mxu0 0.0
    %1205 = vmatpush1.msra.mxu0 0.0
    %1206 = vmatprep.subr.mxu0 0.0
    %1207 = vmatpush1.msra.mxu0 0.0
    %1208 = vmatprep.mubr.f32.mxu0 0.0
    %1209 = vmatmul.mubr.f32.gmra.mrb[0].mxu0 %v1142
    %v1210 = vpop.f32.mrb[0].mxu0
    %v1211 = vadd.f32 %v1129, %v1210
    %v1212 = vpop.f32.mrb[0].mxu0
    %1213 = vdwg.mxu0
    %v1214 = vadd.f32 %v1211, %v204
    %vm1215 = vcmp.gt.s32.totalorder %v27, 6
    %v1216 = vtanh.pop %v1214
    %v1217 = vsel %vm1215, 1, 0
    %1218 = vset.pattern.permute.xlu0 0
    %1219 = vperm.xlu0 %1218, %v1217
    %v1220 = vpop.permute.xlu0 %1219
    %vm1221 = vcmp.eq.s32.totalorder %v1220, 1
    %v1222 = vsel %vm1221, %v1216, %v1054
    %v1223 = vld [vmem:[%s1 + $0x7] sm:$0x1]
    %v1224 = vld [vmem:[%s1 + $0x17] sm:$0x1]
    %v1225 = vld [vmem:[%s1 + $0x27] sm:$0x1]
    %v1226 = vld [vmem:[%s1 + $0x37] sm:$0x1]
    %v1228 = vsel %vm41, %v1222, 0
    %1230 = vmatprep.subr.mxu0 0.0
    %1231 = vmatpush1.msra.mxu0 %v32
    %1232 = vmatprep.subr.mxu0 0.0
    %1233 = vmatpush1.msra.mxu0 %v33
    %1234 = vmatprep.subr.mxu0 0.0
    %1235 = vmatpush1.msra.mxu0 %v34
    %1236 = vmatprep.subr.mxu0 0.0
    %1237 = vmatpush1.msra.mxu0 %v35
    %1238 = vmatprep.subr.mxu0 0.0
    %1239 = vmatpush1.msra.mxu0 0.0
    %1240 = vmatprep.subr.mxu0 0.0
    %1241 = vmatpush1.msra.mxu0 0.0
    %1242 = vmatprep.subr.mxu0 0.0
    %1243 = vmatpush1.msra.mxu0 0.0
    %1244 = vmatprep.subr.mxu0 0.0
    %1245 = vmatpush1.msra.mxu0 0.0
    %1246 = vmatprep.subr.mxu0 0.0
    %1247 = vmatpush1.msra.mxu0 0.0
    %1248 = vmatprep.subr.mxu0 0.0
    %1249 = vmatpush1.msra.mxu0 0.0
    %1250 = vmatprep.subr.mxu0 0.0
    %1251 = vmatpush1.msra.mxu0 0.0
    %1252 = vmatprep.subr.mxu0 0.0
    %1253 = vmatpush1.msra.mxu0 0.0
    %1254 = vmatprep.subr.mxu0 0.0
    %1255 = vmatpush1.msra.mxu0 0.0
    %1256 = vmatprep.subr.mxu0 0.0
    %1257 = vmatpush1.msra.mxu0 0.0
    %1258 = vmatprep.subr.mxu0 0.0
    %1259 = vmatpush1.msra.mxu0 0.0
    %1260 = vmatprep.subr.mxu0 0.0
    %1261 = vmatpush1.msra.mxu0 0.0
    %1262 = vmatprep.subr.mxu0 0.0
    %1263 = vmatpush1.msra.mxu0 0.0
    %1264 = vmatprep.subr.mxu0 0.0
    %1265 = vmatpush1.msra.mxu0 0.0
    %1266 = vmatprep.subr.mxu0 0.0
    %1267 = vmatpush1.msra.mxu0 0.0
    %1268 = vmatprep.subr.mxu0 0.0
    %1269 = vmatpush1.msra.mxu0 0.0
    %1270 = vmatprep.subr.mxu0 0.0
    %1271 = vmatpush1.msra.mxu0 0.0
    %1272 = vmatprep.subr.mxu0 0.0
    %1273 = vmatpush1.msra.mxu0 0.0
    %1274 = vmatprep.subr.mxu0 0.0
    %1275 = vmatpush1.msra.mxu0 0.0
    %1276 = vmatprep.subr.mxu0 0.0
    %1277 = vmatpush1.msra.mxu0 0.0
    %1278 = vmatprep.subr.mxu0 0.0
    %1279 = vmatpush1.msra.mxu0 0.0
    %1280 = vmatprep.subr.mxu0 0.0
    %1281 = vmatpush1.msra.mxu0 0.0
    %1282 = vmatprep.subr.mxu0 0.0
    %1283 = vmatpush1.msra.mxu0 0.0
    %1284 = vmatprep.subr.mxu0 0.0
    %1285 = vmatpush1.msra.mxu0 0.0
    %1286 = vmatprep.subr.mxu0 0.0
    %1287 = vmatpush1.msra.mxu0 0.0
    %1288 = vmatprep.subr.mxu0 0.0
    %1289 = vmatpush1.msra.mxu0 0.0
    %1290 = vmatprep.subr.mxu0 0.0
    %1291 = vmatpush1.msra.mxu0 0.0
    %1292 = vmatprep.subr.mxu0 0.0
    %1293 = vmatpush1.msra.mxu0 0.0
    %1294 = vmatprep.mubr.f32.mxu0 0.0
    %1295 = vmatmul.mubr.f32.gmra.mrb[0].mxu0 %v1228
    %v1296 = vpop.f32.mrb[0].mxu0
    %v1297 = vadd.f32 0.0, %v1296
    %v1298 = vpop.f32.mrb[0].mxu0
    %1299 = vdwg.mxu0
    %v1304 = vrot.slane %v1224, 7
    %v1305 = vsel %vm120, %v1304, %v1223
    %v1306 = vrot.slane %v1225, 6
    %v1307 = vsel %vm123, %v1306, %v1305
    %v1308 = vrot.slane %v1226, 5
    %v1309 = vsel %vm126, %v1308, %v1307
    %v1310 = vsel %vm41, %v1309, 0
    %1312 = vmatprep.subr.mxu0 0.0
    %1313 = vmatpush1.msra.mxu0 %v28
    %1314 = vmatprep.subr.mxu0 0.0
    %1315 = vmatpush1.msra.mxu0 %v29
    %1316 = vmatprep.subr.mxu0 0.0
    %1317 = vmatpush1.msra.mxu0 %v30
    %1318 = vmatprep.subr.mxu0 0.0
    %1319 = vmatpush1.msra.mxu0 %v31
    %1320 = vmatprep.subr.mxu0 0.0
    %1321 = vmatpush1.msra.mxu0 0.0
    %1322 = vmatprep.subr.mxu0 0.0
    %1323 = vmatpush1.msra.mxu0 0.0
    %1324 = vmatprep.subr.mxu0 0.0
    %1325 = vmatpush1.msra.mxu0 0.0
    %1326 = vmatprep.subr.mxu0 0.0
    %1327 = vmatpush1.msra.mxu0 0.0
    %1328 = vmatprep.subr.mxu0 0.0
    %1329 = vmatpush1.msra.mxu0 0.0
    %1330 = vmatprep.subr.mxu0 0.0
    %1331 = vmatpush1.msra.mxu0 0.0
    %1332 = vmatprep.subr.mxu0 0.0
    %1333 = vmatpush1.msra.mxu0 0.0
    %1334 = vmatprep.subr.mxu0 0.0
    %1335 = vmatpush1.msra.mxu0 0.0
    %1336 = vmatprep.subr.mxu0 0.0
    %1337 = vmatpush1.msra.mxu0 0.0
    %1338 = vmatprep.subr.mxu0 0.0
    %1339 = vmatpush1.msra.mxu0 0.0
    %1340 = vmatprep.subr.mxu0 0.0
    %1341 = vmatpush1.msra.mxu0 0.0
    %1342 = vmatprep.subr.mxu0 0.0
    %1343 = vmatpush1.msra.mxu0 0.0
    %1344 = vmatprep.subr.mxu0 0.0
    %1345 = vmatpush1.msra.mxu0 0.0
    %1346 = vmatprep.subr.mxu0 0.0
    %1347 = vmatpush1.msra.mxu0 0.0
    %1348 = vmatprep.subr.mxu0 0.0
    %1349 = vmatpush1.msra.mxu0 0.0
    %1350 = vmatprep.subr.mxu0 0.0
    %1351 = vmatpush1.msra.mxu0 0.0
    %1352 = vmatprep.subr.mxu0 0.0
    %1353 = vmatpush1.msra.mxu0 0.0
    %1354 = vmatprep.subr.mxu0 0.0
    %1355 = vmatpush1.msra.mxu0 0.0
    %1356 = vmatprep.subr.mxu0 0.0
    %1357 = vmatpush1.msra.mxu0 0.0
    %1358 = vmatprep.subr.mxu0 0.0
    %1359 = vmatpush1.msra.mxu0 0.0
    %1360 = vmatprep.subr.mxu0 0.0
    %1361 = vmatpush1.msra.mxu0 0.0
    %1362 = vmatprep.subr.mxu0 0.0
    %1363 = vmatpush1.msra.mxu0 0.0
    %1364 = vmatprep.subr.mxu0 0.0
    %1365 = vmatpush1.msra.mxu0 0.0
    %1366 = vmatprep.subr.mxu0 0.0
    %1367 = vmatpush1.msra.mxu0 0.0
    %1368 = vmatprep.subr.mxu0 0.0
    %1369 = vmatpush1.msra.mxu0 0.0
    %1370 = vmatprep.subr.mxu0 0.0
    %1371 = vmatpush1.msra.mxu0 0.0
    %1372 = vmatprep.subr.mxu0 0.0
    %1373 = vmatpush1.msra.mxu0 0.0
    %1374 = vmatprep.subr.mxu0 0.0
    %1375 = vmatpush1.msra.mxu0 0.0
    %1376 = vmatprep.mubr.f32.mxu0 0.0
    %1377 = vmatmul.mubr.f32.gmra.mrb[0].mxu0 %v1310
    %v1378 = vpop.f32.mrb[0].mxu0
    %v1379 = vadd.f32 %v1297, %v1378
    %v1380 = vpop.f32.mrb[0].mxu0
    %1381 = vdwg.mxu0
    %v1382 = vadd.f32 %v1379, %v204
    %vm1383 = vcmp.gt.s32.totalorder %v27, 7
    %v1384 = vtanh.pop %v1382
    %v1385 = vsel %vm1383, 1, 0
    %1386 = vset.pattern.permute.xlu0 0
    %1387 = vperm.xlu0 %1386, %v1385
    %v1388 = vpop.permute.xlu0 %1387
    %vm1389 = vcmp.eq.s32.totalorder %v1388, 1
    %v1390 = vsel %vm1389, %v1384, %v1222
    %v1391 = vld [vmem:[%s1 + $0x8] sm:$0x1]
    %v1392 = vld [vmem:[%s1 + $0x18] sm:$0x1]
    %v1393 = vld [vmem:[%s1 + $0x28] sm:$0x1]
    %v1394 = vld [vmem:[%s1 + $0x38] sm:$0x1]
    %v1396 = vsel %vm41, %v1390, 0
    %1398 = vmatprep.subr.mxu0 0.0
    %1399 = vmatpush1.msra.mxu0 %v32
    %1400 = vmatprep.subr.mxu0 0.0
    %1401 = vmatpush1.msra.mxu0 %v33
    %1402 = vmatprep.subr.mxu0 0.0
    %1403 = vmatpush1.msra.mxu0 %v34
    %1404 = vmatprep.subr.mxu0 0.0
    %1405 = vmatpush1.msra.mxu0 %v35
    %1406 = vmatprep.subr.mxu0 0.0
    %1407 = vmatpush1.msra.mxu0 0.0
    %1408 = vmatprep.subr.mxu0 0.0
    %1409 = vmatpush1.msra.mxu0 0.0
    %1410 = vmatprep.subr.mxu0 0.0
    %1411 = vmatpush1.msra.mxu0 0.0
    %1412 = vmatprep.subr.mxu0 0.0
    %1413 = vmatpush1.msra.mxu0 0.0
    %1414 = vmatprep.subr.mxu0 0.0
    %1415 = vmatpush1.msra.mxu0 0.0
    %1416 = vmatprep.subr.mxu0 0.0
    %1417 = vmatpush1.msra.mxu0 0.0
    %1418 = vmatprep.subr.mxu0 0.0
    %1419 = vmatpush1.msra.mxu0 0.0
    %1420 = vmatprep.subr.mxu0 0.0
    %1421 = vmatpush1.msra.mxu0 0.0
    %1422 = vmatprep.subr.mxu0 0.0
    %1423 = vmatpush1.msra.mxu0 0.0
    %1424 = vmatprep.subr.mxu0 0.0
    %1425 = vmatpush1.msra.mxu0 0.0
    %1426 = vmatprep.subr.mxu0 0.0
    %1427 = vmatpush1.msra.mxu0 0.0
    %1428 = vmatprep.subr.mxu0 0.0
    %1429 = vmatpush1.msra.mxu0 0.0
    %1430 = vmatprep.subr.mxu0 0.0
    %1431 = vmatpush1.msra.mxu0 0.0
    %1432 = vmatprep.subr.mxu0 0.0
    %1433 = vmatpush1.msra.mxu0 0.0
    %1434 = vmatprep.subr.mxu0 0.0
    %1435 = vmatpush1.msra.mxu0 0.0
    %1436 = vmatprep.subr.mxu0 0.0
    %1437 = vmatpush1.msra.mxu0 0.0
    %1438 = vmatprep.subr.mxu0 0.0
    %1439 = vmatpush1.msra.mxu0 0.0
    %1440 = vmatprep.subr.mxu0 0.0
    %1441 = vmatpush1.msra.mxu0 0.0
    %1442 = vmatprep.subr.mxu0 0.0
    %1443 = vmatpush1.msra.mxu0 0.0
    %1444 = vmatprep.subr.mxu0 0.0
    %1445 = vmatpush1.msra.mxu0 0.0
    %1446 = vmatprep.subr.mxu0 0.0
    %1447 = vmatpush1.msra.mxu0 0.0
    %1448 = vmatprep.subr.mxu0 0.0
    %1449 = vmatpush1.msra.mxu0 0.0
    %1450 = vmatprep.subr.mxu0 0.0
    %1451 = vmatpush1.msra.mxu0 0.0
    %1452 = vmatprep.subr.mxu0 0.0
    %1453 = vmatpush1.msra.mxu0 0.0
    %1454 = vmatprep.subr.mxu0 0.0
    %1455 = vmatpush1.msra.mxu0 0.0
    %1456 = vmatprep.subr.mxu0 0.0
    %1457 = vmatpush1.msra.mxu0 0.0
    %1458 = vmatprep.subr.mxu0 0.0
    %1459 = vmatpush1.msra.mxu0 0.0
    %1460 = vmatprep.subr.mxu0 0.0
    %1461 = vmatpush1.msra.mxu0 0.0
    %1462 = vmatprep.mubr.f32.mxu0 0.0
    %1463 = vmatmul.mubr.f32.gmra.mrb[0].mxu0 %v1396
    %v1464 = vpop.f32.mrb[0].mxu0
    %v1465 = vadd.f32 0.0, %v1464
    %v1466 = vpop.f32.mrb[0].mxu0
    %1467 = vdwg.mxu0
    %v1472 = vrot.slane %v1392, 7
    %v1473 = vsel %vm120, %v1472, %v1391
    %v1474 = vrot.slane %v1393, 6
    %v1475 = vsel %vm123, %v1474, %v1473
    %v1476 = vrot.slane %v1394, 5
    %v1477 = vsel %vm126, %v1476, %v1475
    %v1478 = vsel %vm41, %v1477, 0
    %1480 = vmatprep.subr.mxu0 0.0
    %1481 = vmatpush1.msra.mxu0 %v28
    %1482 = vmatprep.subr.mxu0 0.0
    %1483 = vmatpush1.msra.mxu0 %v29
    %1484 = vmatprep.subr.mxu0 0.0
    %1485 = vmatpush1.msra.mxu0 %v30
    %1486 = vmatprep.subr.mxu0 0.0
    %1487 = vmatpush1.msra.mxu0 %v31
    %1488 = vmatprep.subr.mxu0 0.0
    %1489 = vmatpush1.msra.mxu0 0.0
    %1490 = vmatprep.subr.mxu0 0.0
    %1491 = vmatpush1.msra.mxu0 0.0
    %1492 = vmatprep.subr.mxu0 0.0
    %1493 = vmatpush1.msra.mxu0 0.0
    %1494 = vmatprep.subr.mxu0 0.0
    %1495 = vmatpush1.msra.mxu0 0.0
    %1496 = vmatprep.subr.mxu0 0.0
    %1497 = vmatpush1.msra.mxu0 0.0
    %1498 = vmatprep.subr.mxu0 0.0
    %1499 = vmatpush1.msra.mxu0 0.0
    %1500 = vmatprep.subr.mxu0 0.0
    %1501 = vmatpush1.msra.mxu0 0.0
    %1502 = vmatprep.subr.mxu0 0.0
    %1503 = vmatpush1.msra.mxu0 0.0
    %1504 = vmatprep.subr.mxu0 0.0
    %1505 = vmatpush1.msra.mxu0 0.0
    %1506 = vmatprep.subr.mxu0 0.0
    %1507 = vmatpush1.msra.mxu0 0.0
    %1508 = vmatprep.subr.mxu0 0.0
    %1509 = vmatpush1.msra.mxu0 0.0
    %1510 = vmatprep.subr.mxu0 0.0
    %1511 = vmatpush1.msra.mxu0 0.0
    %1512 = vmatprep.subr.mxu0 0.0
    %1513 = vmatpush1.msra.mxu0 0.0
    %1514 = vmatprep.subr.mxu0 0.0
    %1515 = vmatpush1.msra.mxu0 0.0
    %1516 = vmatprep.subr.mxu0 0.0
    %1517 = vmatpush1.msra.mxu0 0.0
    %1518 = vmatprep.subr.mxu0 0.0
    %1519 = vmatpush1.msra.mxu0 0.0
    %1520 = vmatprep.subr.mxu0 0.0
    %1521 = vmatpush1.msra.mxu0 0.0
    %1522 = vmatprep.subr.mxu0 0.0
    %1523 = vmatpush1.msra.mxu0 0.0
    %1524 = vmatprep.subr.mxu0 0.0
    %1525 = vmatpush1.msra.mxu0 0.0
    %1526 = vmatprep.subr.mxu0 0.0
    %1527 = vmatpush1.msra.mxu0 0.0
    %1528 = vmatprep.subr.mxu0 0.0
    %1529 = vmatpush1.msra.mxu0 0.0
    %1530 = vmatprep.subr.mxu0 0.0
    %1531 = vmatpush1.msra.mxu0 0.0
    %1532 = vmatprep.subr.mxu0 0.0
    %1533 = vmatpush1.msra.mxu0 0.0
    %1534 = vmatprep.subr.mxu0 0.0
    %1535 = vmatpush1.msra.mxu0 0.0
    %1536 = vmatprep.subr.mxu0 0.0
    %1537 = vmatpush1.msra.mxu0 0.0
    %1538 = vmatprep.subr.mxu0 0.0
    %1539 = vmatpush1.msra.mxu0 0.0
    %1540 = vmatprep.subr.mxu0 0.0
    %1541 = vmatpush1.msra.mxu0 0.0
    %1542 = vmatprep.subr.mxu0 0.0
    %1543 = vmatpush1.msra.mxu0 0.0
    %1544 = vmatprep.mubr.f32.mxu0 0.0
    %1545 = vmatmul.mubr.f32.gmra.mrb[0].mxu0 %v1478
    %v1546 = vpop.f32.mrb[0].mxu0
    %v1547 = vadd.f32 %v1465, %v1546
    %v1548 = vpop.f32.mrb[0].mxu0
    %1549 = vdwg.mxu0
    %v1550 = vadd.f32 %v1547, %v204
    %vm1551 = vcmp.gt.s32.totalorder %v27, 8
    %v1552 = vtanh.pop %v1550
    %v1553 = vsel %vm1551, 1, 0
    %1554 = vset.pattern.permute.xlu0 0
    %1555 = vperm.xlu0 %1554, %v1553
    %v1556 = vpop.permute.xlu0 %1555
    %vm1557 = vcmp.eq.s32.totalorder %v1556, 1
    %v1558 = vsel %vm1557, %v1552, %v1390
    %v1559 = vld [vmem:[%s1 + $0x9] sm:$0x1]
    %v1560 = vld [vmem:[%s1 + $0x19] sm:$0x1]
    %v1561 = vld [vmem:[%s1 + $0x29] sm:$0x1]
    %v1562 = vld [vmem:[%s1 + $0x39] sm:$0x1]
    %v1564 = vsel %vm41, %v1558, 0
    %1566 = vmatprep.subr.mxu0 0.0
    %1567 = vmatpush1.msra.mxu0 %v32
    %1568 = vmatprep.subr.mxu0 0.0
    %1569 = vmatpush1.msra.mxu0 %v33
    %1570 = vmatprep.subr.mxu0 0.0
    %1571 = vmatpush1.msra.mxu0 %v34
    %1572 = vmatprep.subr.mxu0 0.0
    %1573 = vmatpush1.msra.mxu0 %v35
    %1574 = vmatprep.subr.mxu0 0.0
    %1575 = vmatpush1.msra.mxu0 0.0
    %1576 = vmatprep.subr.mxu0 0.0
    %1577 = vmatpush1.msra.mxu0 0.0
    %1578 = vmatprep.subr.mxu0 0.0
    %1579 = vmatpush1.msra.mxu0 0.0
    %1580 = vmatprep.subr.mxu0 0.0
    %1581 = vmatpush1.msra.mxu0 0.0
    %1582 = vmatprep.subr.mxu0 0.0
    %1583 = vmatpush1.msra.mxu0 0.0
    %1584 = vmatprep.subr.mxu0 0.0
    %1585 = vmatpush1.msra.mxu0 0.0
    %1586 = vmatprep.subr.mxu0 0.0
    %1587 = vmatpush1.msra.mxu0 0.0
    %1588 = vmatprep.subr.mxu0 0.0
    %1589 = vmatpush1.msra.mxu0 0.0
    %1590 = vmatprep.subr.mxu0 0.0
    %1591 = vmatpush1.msra.mxu0 0.0
    %1592 = vmatprep.subr.mxu0 0.0
    %1593 = vmatpush1.msra.mxu0 0.0
    %1594 = vmatprep.subr.mxu0 0.0
    %1595 = vmatpush1.msra.mxu0 0.0
    %1596 = vmatprep.subr.mxu0 0.0
    %1597 = vmatpush1.msra.mxu0 0.0
    %1598 = vmatprep.subr.mxu0 0.0
    %1599 = vmatpush1.msra.mxu0 0.0
    %1600 = vmatprep.subr.mxu0 0.0
    %1601 = vmatpush1.msra.mxu0 0.0
    %1602 = vmatprep.subr.mxu0 0.0
    %1603 = vmatpush1.msra.mxu0 0.0
    %1604 = vmatprep.subr.mxu0 0.0
    %1605 = vmatpush1.msra.mxu0 0.0
    %1606 = vmatprep.subr.mxu0 0.0
    %1607 = vmatpush1.msra.mxu0 0.0
    %1608 = vmatprep.subr.mxu0 0.0
    %1609 = vmatpush1.msra.mxu0 0.0
    %1610 = vmatprep.subr.mxu0 0.0
    %1611 = vmatpush1.msra.mxu0 0.0
    %1612 = vmatprep.subr.mxu0 0.0
    %1613 = vmatpush1.msra.mxu0 0.0
    %1614 = vmatprep.subr.mxu0 0.0
    %1615 = vmatpush1.msra.mxu0 0.0
    %1616 = vmatprep.subr.mxu0 0.0
    %1617 = vmatpush1.msra.mxu0 0.0
    %1618 = vmatprep.subr.mxu0 0.0
    %1619 = vmatpush1.msra.mxu0 0.0
    %1620 = vmatprep.subr.mxu0 0.0
    %1621 = vmatpush1.msra.mxu0 0.0
    %1622 = vmatprep.subr.mxu0 0.0
    %1623 = vmatpush1.msra.mxu0 0.0
    %1624 = vmatprep.subr.mxu0 0.0
    %1625 = vmatpush1.msra.mxu0 0.0
    %1626 = vmatprep.subr.mxu0 0.0
    %1627 = vmatpush1.msra.mxu0 0.0
    %1628 = vmatprep.subr.mxu0 0.0
    %1629 = vmatpush1.msra.mxu0 0.0
    %1630 = vmatprep.mubr.f32.mxu0 0.0
    %1631 = vmatmul.mubr.f32.gmra.mrb[0].mxu0 %v1564
    %v1632 = vpop.f32.mrb[0].mxu0
    %v1633 = vadd.f32 0.0, %v1632
    %v1634 = vpop.f32.mrb[0].mxu0
    %1635 = vdwg.mxu0
    %v1640 = vrot.slane %v1560, 7
    %v1641 = vsel %vm120, %v1640, %v1559
    %v1642 = vrot.slane %v1561, 6
    %v1643 = vsel %vm123, %v1642, %v1641
    %v1644 = vrot.slane %v1562, 5
    %v1645 = vsel %vm126, %v1644, %v1643
    %v1646 = vsel %vm41, %v1645, 0
    %1648 = vmatprep.subr.mxu0 0.0
    %1649 = vmatpush1.msra.mxu0 %v28
    %1650 = vmatprep.subr.mxu0 0.0
    %1651 = vmatpush1.msra.mxu0 %v29
    %1652 = vmatprep.subr.mxu0 0.0
    %1653 = vmatpush1.msra.mxu0 %v30
    %1654 = vmatprep.subr.mxu0 0.0
    %1655 = vmatpush1.msra.mxu0 %v31
    %1656 = vmatprep.subr.mxu0 0.0
    %1657 = vmatpush1.msra.mxu0 0.0
    %1658 = vmatprep.subr.mxu0 0.0
    %1659 = vmatpush1.msra.mxu0 0.0
    %1660 = vmatprep.subr.mxu0 0.0
    %1661 = vmatpush1.msra.mxu0 0.0
    %1662 = vmatprep.subr.mxu0 0.0
    %1663 = vmatpush1.msra.mxu0 0.0
    %1664 = vmatprep.subr.mxu0 0.0
    %1665 = vmatpush1.msra.mxu0 0.0
    %1666 = vmatprep.subr.mxu0 0.0
    %1667 = vmatpush1.msra.mxu0 0.0
    %1668 = vmatprep.subr.mxu0 0.0
    %1669 = vmatpush1.msra.mxu0 0.0
    %1670 = vmatprep.subr.mxu0 0.0
    %1671 = vmatpush1.msra.mxu0 0.0
    %1672 = vmatprep.subr.mxu0 0.0
    %1673 = vmatpush1.msra.mxu0 0.0
    %1674 = vmatprep.subr.mxu0 0.0
    %1675 = vmatpush1.msra.mxu0 0.0
    %1676 = vmatprep.subr.mxu0 0.0
    %1677 = vmatpush1.msra.mxu0 0.0
    %1678 = vmatprep.subr.mxu0 0.0
    %1679 = vmatpush1.msra.mxu0 0.0
    %1680 = vmatprep.subr.mxu0 0.0
    %1681 = vmatpush1.msra.mxu0 0.0
    %1682 = vmatprep.subr.mxu0 0.0
    %1683 = vmatpush1.msra.mxu0 0.0
    %1684 = vmatprep.subr.mxu0 0.0
    %1685 = vmatpush1.msra.mxu0 0.0
    %1686 = vmatprep.subr.mxu0 0.0
    %1687 = vmatpush1.msra.mxu0 0.0
    %1688 = vmatprep.subr.mxu0 0.0
    %1689 = vmatpush1.msra.mxu0 0.0
    %1690 = vmatprep.subr.mxu0 0.0
    %1691 = vmatpush1.msra.mxu0 0.0
    %1692 = vmatprep.subr.mxu0 0.0
    %1693 = vmatpush1.msra.mxu0 0.0
    %1694 = vmatprep.subr.mxu0 0.0
    %1695 = vmatpush1.msra.mxu0 0.0
    %1696 = vmatprep.subr.mxu0 0.0
    %1697 = vmatpush1.msra.mxu0 0.0
    %1698 = vmatprep.subr.mxu0 0.0
    %1699 = vmatpush1.msra.mxu0 0.0
    %1700 = vmatprep.subr.mxu0 0.0
    %1701 = vmatpush1.msra.mxu0 0.0
    %1702 = vmatprep.subr.mxu0 0.0
    %1703 = vmatpush1.msra.mxu0 0.0
    %1704 = vmatprep.subr.mxu0 0.0
    %1705 = vmatpush1.msra.mxu0 0.0
    %1706 = vmatprep.subr.mxu0 0.0
    %1707 = vmatpush1.msra.mxu0 0.0
    %1708 = vmatprep.subr.mxu0 0.0
    %1709 = vmatpush1.msra.mxu0 0.0
    %1710 = vmatprep.subr.mxu0 0.0
    %1711 = vmatpush1.msra.mxu0 0.0
    %1712 = vmatprep.mubr.f32.mxu0 0.0
    %1713 = vmatmul.mubr.f32.gmra.mrb[0].mxu0 %v1646
    %v1714 = vpop.f32.mrb[0].mxu0
    %v1715 = vadd.f32 %v1633, %v1714
    %v1716 = vpop.f32.mrb[0].mxu0
    %1717 = vdwg.mxu0
    %v1718 = vadd.f32 %v1715, %v204
    %vm1719 = vcmp.gt.s32.totalorder %v27, 9
    %v1720 = vtanh.pop %v1718
    %v1721 = vsel %vm1719, 1, 0
    %1722 = vset.pattern.permute.xlu0 0
    %1723 = vperm.xlu0 %1722, %v1721
    %v1724 = vpop.permute.xlu0 %1723
    %vm1725 = vcmp.eq.s32.totalorder %v1724, 1
    %v1726 = vsel %vm1725, %v1720, %v1558
    %v1727 = vld [vmem:[%s5] sm:$0xff]
    %v1728 = vld [vmem:[%s5 + $0x8] sm:$0xff]
    %v1729 = vld [vmem:[%s5 + $0x10] sm:$0xff]
    %v1730 = vld [vmem:[%s5 + $0x18] sm:$0xff]
    %v1731 = vld [vmem:[%s6] sm:$0x1]
    %v1733 = vlaneseq
    %v1734 = vshrl.u32 %v1733, 7
    %v1735 = vsub.s32 0, %v1734
    %v1736 = vrot.slane %v1731, %v1735
    %v1739 = vsel %vm41, %v1726, 0
    %1741 = vmatprep.subr.mxu0 0.0
    %1742 = vmatpush1.msra.mxu0 %v1727
    %1743 = vmatprep.subr.mxu0 0.0
    %1744 = vmatpush1.msra.mxu0 %v1728
    %1745 = vmatprep.subr.mxu0 0.0
    %1746 = vmatpush1.msra.mxu0 %v1729
    %1747 = vmatprep.subr.mxu0 0.0
    %1748 = vmatpush1.msra.mxu0 %v1730
    %1749 = vmatprep.subr.mxu0 0.0
    %1750 = vmatpush1.msra.mxu0 0.0
    %1751 = vmatprep.subr.mxu0 0.0
    %1752 = vmatpush1.msra.mxu0 0.0
    %1753 = vmatprep.subr.mxu0 0.0
    %1754 = vmatpush1.msra.mxu0 0.0
    %1755 = vmatprep.subr.mxu0 0.0
    %1756 = vmatpush1.msra.mxu0 0.0
    %1757 = vmatprep.subr.mxu0 0.0
    %1758 = vmatpush1.msra.mxu0 0.0
    %1759 = vmatprep.subr.mxu0 0.0
    %1760 = vmatpush1.msra.mxu0 0.0
    %1761 = vmatprep.subr.mxu0 0.0
    %1762 = vmatpush1.msra.mxu0 0.0
    %1763 = vmatprep.subr.mxu0 0.0
    %1764 = vmatpush1.msra.mxu0 0.0
    %1765 = vmatprep.subr.mxu0 0.0
    %1766 = vmatpush1.msra.mxu0 0.0
    %1767 = vmatprep.subr.mxu0 0.0
    %1768 = vmatpush1.msra.mxu0 0.0
    %1769 = vmatprep.subr.mxu0 0.0
    %1770 = vmatpush1.msra.mxu0 0.0
    %1771 = vmatprep.subr.mxu0 0.0
    %1772 = vmatpush1.msra.mxu0 0.0
    %1773 = vmatprep.subr.mxu0 0.0
    %1774 = vmatpush1.msra.mxu0 0.0
    %1775 = vmatprep.subr.mxu0 0.0
    %1776 = vmatpush1.msra.mxu0 0.0
    %1777 = vmatprep.subr.mxu0 0.0
    %1778 = vmatpush1.msra.mxu0 0.0
    %1779 = vmatprep.subr.mxu0 0.0
    %1780 = vmatpush1.msra.mxu0 0.0
    %1781 = vmatprep.subr.mxu0 0.0
    %1782 = vmatpush1.msra.mxu0 0.0
    %1783 = vmatprep.subr.mxu0 0.0
    %1784 = vmatpush1.msra.mxu0 0.0
    %1785 = vmatprep.subr.mxu0 0.0
    %1786 = vmatpush1.msra.mxu0 0.0
    %1787 = vmatprep.subr.mxu0 0.0
    %1788 = vmatpush1.msra.mxu0 0.0
    %1789 = vmatprep.subr.mxu0 0.0
    %1790 = vmatpush1.msra.mxu0 0.0
    %1791 = vmatprep.subr.mxu0 0.0
    %1792 = vmatpush1.msra.mxu0 0.0
    %1793 = vmatprep.subr.mxu0 0.0
    %1794 = vmatpush1.msra.mxu0 0.0
    %1795 = vmatprep.subr.mxu0 0.0
    %1796 = vmatpush1.msra.mxu0 0.0
    %1797 = vmatprep.subr.mxu0 0.0
    %1798 = vmatpush1.msra.mxu0 0.0
    %1799 = vmatprep.subr.mxu0 0.0
    %1800 = vmatpush1.msra.mxu0 0.0
    %1801 = vmatprep.subr.mxu0 0.0
    %1802 = vmatpush1.msra.mxu0 0.0
    %1803 = vmatprep.subr.mxu0 0.0
    %1804 = vmatpush1.msra.mxu0 0.0
    %1805 = vmatprep.mubr.f32.mxu0 0.0
    %1806 = vmatmul.mubr.f32.gmra.mrb[0].mxu0 %v1739
    %v1807 = vpop.f32.mrb[0].mxu0
    %v1808 = vadd.f32 %v1736, %v1807
    %v1809 = vpop.f32.mrb[0].mxu0
    %1810 = vdwg.mxu0
    %vm1811 = vcmask 60416
    %1812 = vst.msk [vmem:[#allocation2] sm:$0xf] %vm1811, %v1808
    // Predicated region
    $region30: #{tpu_custom_call.1} parent=1 // pred_check
      _
    $region31: #{tpu_custom_call.1} parent=1 // pred_check_branch
      %1814 = sbr.rel (0) target = $region33
    $region32: #{tpu_custom_call.1} parent=1 // pred_region
      %s1816 = ssub.s32 64, 64
      %1817 = vsyncadd [#allocation3], %s1816
      %s1819 = sshll.u32 [#allocation2], 4
      %s1820 = int_to_ptr.vmem [resolvable:$true] %s1819
      %1822 = dma.vmem_to_hbm [thread:$0]  %s1820, 64, %s7, [#allocation3]
    $region33: #{tpu_custom_call.1} parent=1 // pred_fallthru
      _
    // Predicated region
    $region34: #{tpu_custom_call.1} parent=1 // pred_check
      _
    $region35: #{tpu_custom_call.1} parent=1 // pred_check_branch
      %1824 = sbr.rel (0) target = $region37
    $region36: #{tpu_custom_call.1} parent=1 // pred_region
      %1825 = dma.done [#allocation3], 64
    $region37: #{tpu_custom_call.1} parent=1 // pred_fallthru
      _
    %1826 = vsyncpa [#allocation3], 1

</llo_original>
